<compile_context>
chip_gen: v7x
topology: tpu7x:2x2x1
jax: 0.10.0
libtpu: 0.0.40
codegen_flags: <defaults>
</compile_context>

<pallas_src>
import functools

import jax
import jax.numpy as jnp
import numpy as np
from jax import lax
from jax.experimental import pallas as pl
from jax.experimental.pallas import tpu as pltpu


def _round_up(x, m):
    return (x + m - 1) // m * m


def _oc_context_kernel(xf_ref, xq_ref,
                       wkv_ref, bkv_ref,    # fused/padded f_key|f_value|1 projection
                       wf_ref, bf_ref,      # fused W + conv_bn_dropout, transposed
                       out_ref, *, kpad):
    xf = xf_ref[0]                            # (S,  C)  bf16  (keys / values)
    xq = xq_ref[0]                            # (tq, C)  bf16  (query stripe)
    w = wkv_ref[...]                          # (C, kpad+Vc+1) bf16
    b = bkv_ref[...]                          # (1, kpad+Vc+1) f32

    # Full-length projection: [key (padded to 128 lanes) | value | 1].
    projf = jnp.dot(xf, w, preferred_element_type=jnp.float32) + b
    key = jnp.maximum(projf[:, :kpad], 0.0)   # (S, kpad); padded cols stay 0
    value_aug = projf[:, kpad:]               # (S, Vc+1); lane-aligned view

    # Query-stripe projection (recomputed per stripe: tiny, keeps q-axis parallel).
    projq = jnp.dot(xq, w, preferred_element_type=jnp.float32) + b
    query = jnp.maximum(projq[:, :kpad], 0.0)  # (tq, kpad)

    # sim = query @ key^T (kc**-0.5 scale pre-folded; zero pad cols are exact).
    sim = lax.dot_general(query.astype(jnp.bfloat16), key.astype(jnp.bfloat16),
                          dimension_numbers=(((1,), (1,)), ((), ())),
                          preferred_element_type=jnp.float32)        # (tq, S)
    sim = sim - jnp.max(sim, axis=-1, keepdims=True)
    p = jnp.exp(sim).astype(jnp.bfloat16)      # unnormalized probs (f32 exp, bf16 MXU feed)

    # ctx_aug = p @ [value | 1]: last column is the softmax denominator,
    # computed on the (near-idle) MXU instead of an XLU cross-lane sum.
    ctx_aug = jnp.dot(p, value_aug.astype(jnp.bfloat16),
                      preferred_element_type=jnp.float32)            # (tq, Vc+1)
    ctx = ctx_aug[:, :-1] * pl.reciprocal(ctx_aug[:, -1:], approx=True)

    # Fused (W conv -> conv_bn_dropout conv -> BN -> ReLU), emitted transposed
    # so the store is lane-dense: wf_ref is (Co, Vc), result is (Co, tq).
    out_t = lax.dot_general(wf_ref[...], ctx.astype(jnp.bfloat16),
                            dimension_numbers=(((1,), (1,)), ((), ())),
                            preferred_element_type=jnp.float32) + bf_ref[...]
    out_ref[0] = jnp.maximum(out_t, 0.0).astype(out_ref.dtype)       # (Co, tq)


def _fuse_params(p, key_channels):
    """Exact wrapper-side folds: BN, softmax scale, lane padding, denom column,
    W∘conv_bn fusion.  Matmul weights are returned in bf16, biases in f32."""
    C = p["wk"].shape[0]
    kpad = max(128, _round_up(key_channels, 128))
    s = float(key_channels) ** -0.25           # query AND key side -> Kc**-0.5 total

    wk_f = p["wk"] * p["gk"] * s               # (C, Kc)
    bk_f = (p["bk"] * p["gk"] + p["sk"]) * s   # (1, Kc)
    wk_pad = jnp.concatenate(
        [wk_f, jnp.zeros((C, kpad - key_channels), jnp.float32)], axis=1)
    bk_pad = jnp.concatenate(
        [bk_f, jnp.zeros((1, kpad - key_channels), jnp.float32)], axis=1)

    # f_value projection augmented with a constant-1 column (weight 0, bias 1)
    # so p @ value_aug also yields the softmax denominator (exact).
    wv_aug = jnp.concatenate([p["wv"], jnp.zeros((C, 1), jnp.float32)], axis=1)
    bv_aug = jnp.concatenate([p["bv"], jnp.ones((1, 1), jnp.float32)], axis=1)

    w_kqv = jnp.concatenate([wk_pad, wv_aug], axis=1)   # (C, kpad+Vc+1)
    b_kqv = jnp.concatenate([bk_pad, bv_aug], axis=1)   # (1, kpad+Vc+1)

    wo_f = p["wo"] * p["go"]                   # BN folded into final conv
    bo_f = p["bo"] * p["go"] + p["so"]
    w_fused = p["ww"] @ wo_f                   # (Vc, Co)
    b_fused = p["bw"] @ wo_f + bo_f            # (1, Co)
    return (w_kqv.astype(jnp.bfloat16), b_kqv,
            w_fused.T.astype(jnp.bfloat16), b_fused.T, kpad)   # (Co,Vc) bf16, (Co,1) f32


def baseoc_context_forward(x_nsc, params, key_channels, *, tq=128):
    """x_nsc: (N, S, C) float32.  Returns (N, Cout, S) — NCHW-ordered channels."""
    N, S, C = x_nsc.shape
    w_kqv, b_kqv, wf_t, bf_t, kpad = _fuse_params(params, key_channels)
    Co = wf_t.shape[0]

    tq = min(tq, S)
    assert S % tq == 0, "spatial size must be a multiple of the query tile"

    x_bf16 = x_nsc.astype(jnp.bfloat16)        # MXU is a bf16 engine; accumulate f32
    kernel = functools.partial(_oc_context_kernel, kpad=kpad)

    def full(arr):
        return pl.BlockSpec(arr.shape, lambda b, q: (0,) * arr.ndim)

    return pl.pallas_call(
        kernel,
        out_shape=jax.ShapeDtypeStruct((N, Co, S), jnp.float32),
        grid_spec=pltpu.PrefetchScalarGridSpec(
            num_scalar_prefetch=0,
            grid=(N, S // tq),
            in_specs=[
                pl.BlockSpec((1, S, C), lambda b, q: (b, 0, 0)),   # keys/values (per image)
                pl.BlockSpec((1, tq, C), lambda b, q: (b, q, 0)),  # query stripe
                full(w_kqv), full(b_kqv), full(wf_t), full(bf_t),
            ],
            out_specs=pl.BlockSpec((1, Co, tq), lambda b, q: (b, 0, q)),
        ),
        compiler_params=pltpu.CompilerParams(
            dimension_semantics=("parallel", "parallel"),
            vmem_limit_bytes=32 << 20),
    )(x_bf16, x_bf16, w_kqv, b_kqv, wf_t, bf_t)


def _reference(x_nsc, p):
    """Pure-JAX f32 reference of the original (unfused) forward, (N, S, Co)."""
    kq = jnp.maximum((x_nsc @ p["wk"] + p["bk"]) * p["gk"] + p["sk"], 0.0)
    value = x_nsc @ p["wv"] + p["bv"]
    kc = kq.shape[-1]
    sim = jnp.einsum("nsk,ntk->nst", kq, kq) * (float(kc) ** -0.5)
    sim = jax.nn.softmax(sim, axis=-1)
    ctx = jnp.einsum("nst,ntv->nsv", sim, value)
    ctx = ctx @ p["ww"] + p["bw"]
    out = jnp.maximum((ctx @ p["wo"] + p["bo"]) * p["go"] + p["so"], 0.0)
    return out


if __name__ == "__main__":
    # Small shapes: N=2, in_channels=out_channels=32, key=value=16, H=W=16.
    N, C, H, W = 2, 32, 16, 16
    Kc, Vc, Co = 16, 16, 32
    S = H * W

    key = jax.random.PRNGKey(0)
    ks = jax.random.split(key, 16)

    x_nchw = jax.random.normal(ks[0], (N, C, H, W), jnp.float32)
    # NCHW -> (N, S, C)
    x_nsc = jnp.transpose(x_nchw.reshape(N, C, S), (0, 2, 1))

    def nrm(k, shape, scale=0.1):
        return (jax.random.normal(k, shape, jnp.float32) * scale).astype(jnp.float32)

    params = {
        # f_key / f_query: conv (C->Kc) + folded BN (scale/shift)
        "wk": nrm(ks[1], (C, Kc)),
        "bk": nrm(ks[2], (1, Kc)),
        "gk": 1.0 + nrm(ks[3], (1, Kc), 0.05),
        "sk": nrm(ks[4], (1, Kc), 0.05),
        # f_value: conv (C->Vc), bias only (act_cfg=None, no norm)
        "wv": nrm(ks[5], (C, Vc)),
        "bv": nrm(ks[6], (1, Vc)),
        # W: conv (Vc->Co)   (nonzero deterministic init instead of torch's zeros)
        "ww": nrm(ks[7], (Vc, Co)),
        "bw": nrm(ks[8], (1, Co)),
        # conv_bn_dropout: conv (Co->Co) + folded BN
        "wo": nrm(ks[9], (Co, Co)),
        "bo": nrm(ks[10], (1, Co)),
        "go": 1.0 + nrm(ks[11], (1, Co), 0.05),
        "so": nrm(ks[12], (1, Co), 0.05),
    }

    out = baseoc_context_forward(x_nsc, params, Kc, tq=128)   # (N, Co, S)
    out = jax.block_until_ready(out)

    ref = jax.block_until_ready(_reference(x_nsc, params))    # (N, S, Co)
    # Tolerances loosened vs. the pure-f32 version: MXU operands are bf16
    # (f32 accumulation) and the normalization uses the approx EUP reciprocal.
    np.testing.assert_allclose(np.asarray(out),
                               np.asarray(jnp.transpose(ref, (0, 2, 1))),
                               rtol=5e-2, atol=5e-3)

    # Output is already channel-major: (N, Co, S) -> NCHW is a pure reshape.
    _ = out.reshape(N, Co, H, W)

    print("KERNEL_OK")
</pallas_src>

<mosaic_0001>
module attributes {stable_mosaic.version = 11 : i64} {
  func.func @_oc_context_kernel(%arg0: i32, %arg1: i32, %arg2: memref<1x256x32xbf16, #tpu.memory_space<vmem>>, %arg3: memref<1x128x32xbf16, #tpu.memory_space<vmem>>, %arg4: memref<32x145xbf16, #tpu.memory_space<vmem>>, %arg5: memref<1x145xf32, #tpu.memory_space<vmem>>, %arg6: memref<32x16xbf16, #tpu.memory_space<vmem>>, %arg7: memref<32x1xf32, #tpu.memory_space<vmem>>, %arg8: memref<1x32x128xf32, #tpu.memory_space<vmem>>) attributes {dimension_semantics = [#tpu.dimension_semantics<parallel>, #tpu.dimension_semantics<parallel>], iteration_bounds = array<i64: 2, 2>, scalar_prefetch = 0 : i64, scratch_operands = 0 : i64, tpu.core_type = #tpu.core_type<tc>, window_params = [{transform_indices = @transform_0, window_bounds = array<i64: 1, 256, 32>}, {transform_indices = @transform_1, window_bounds = array<i64: 1, 128, 32>}, {pipeline_mode = #tpu.pipeline_mode<synchronous>, transform_indices = @transform_2, window_bounds = array<i64: 32, 145>}, {pipeline_mode = #tpu.pipeline_mode<synchronous>, transform_indices = @transform_3, window_bounds = array<i64: 1, 145>}, {pipeline_mode = #tpu.pipeline_mode<synchronous>, transform_indices = @transform_4, window_bounds = array<i64: 32, 16>}, {pipeline_mode = #tpu.pipeline_mode<synchronous>, transform_indices = @transform_5, window_bounds = array<i64: 32, 1>}, {transform_indices = @transform_6, window_bounds = array<i64: 1, 32, 128>}]} {
    %c0 = arith.constant 0 : index
    %c0_0 = arith.constant 0 : index
    %c0_1 = arith.constant 0 : index
    %0 = vector.load %arg2[%c0, %c0_0, %c0_1] : memref<1x256x32xbf16, #tpu.memory_space<vmem>>, vector<1x256x32xbf16>
    %1 = vector.shape_cast %0 : vector<1x256x32xbf16> to vector<256x32xbf16>
    %c0_2 = arith.constant 0 : index
    %c0_3 = arith.constant 0 : index
    %c0_4 = arith.constant 0 : index
    %2 = vector.load %arg3[%c0_2, %c0_3, %c0_4] : memref<1x128x32xbf16, #tpu.memory_space<vmem>>, vector<1x128x32xbf16>
    %3 = vector.shape_cast %2 : vector<1x128x32xbf16> to vector<128x32xbf16>
    %c0_5 = arith.constant 0 : index
    %c0_6 = arith.constant 0 : index
    %4 = vector.load %arg4[%c0_5, %c0_6] : memref<32x145xbf16, #tpu.memory_space<vmem>>, vector<32x145xbf16>
    %c0_7 = arith.constant 0 : index
    %c0_8 = arith.constant 0 : index
    %5 = vector.load %arg5[%c0_7, %c0_8] : memref<1x145xf32, #tpu.memory_space<vmem>>, vector<1x145xf32>
    %cst = arith.constant dense<0.000000e+00> : vector<256x145xf32>
    %6 = tpu.matmul %1, %4, %cst {dimension_numbers = #tpu.dot_dimension_numbers<[1], [0], [0], [1], [0, 0, 1, 1], [], []>} : vector<256x32xbf16>, vector<32x145xbf16>, vector<256x145xf32> -> vector<256x145xf32>
    %7 = vector.broadcast %5 : vector<1x145xf32> to vector<256x145xf32>
    %8 = arith.addf %6, %7 : vector<256x145xf32>
    %9 = vector.extract_strided_slice %8 {offsets = [0, 0], sizes = [256, 128], strides = [1, 1]} : vector<256x145xf32> to vector<256x128xf32>
    %cst_9 = arith.constant 0.000000e+00 : f32
    %10 = vector.broadcast %cst_9 : f32 to vector<256x128xf32>
    %11 = arith.maximumf %9, %10 : vector<256x128xf32>
    %12 = vector.extract_strided_slice %8 {offsets = [0, 128], sizes = [256, 17], strides = [1, 1]} : vector<256x145xf32> to vector<256x17xf32>
    %cst_10 = arith.constant dense<0.000000e+00> : vector<128x145xf32>
    %13 = tpu.matmul %3, %4, %cst_10 {dimension_numbers = #tpu.dot_dimension_numbers<[1], [0], [0], [1], [0, 0, 1, 1], [], []>} : vector<128x32xbf16>, vector<32x145xbf16>, vector<128x145xf32> -> vector<128x145xf32>
    %14 = vector.broadcast %5 : vector<1x145xf32> to vector<128x145xf32>
    %15 = arith.addf %13, %14 : vector<128x145xf32>
    %16 = vector.extract_strided_slice %15 {offsets = [0, 0], sizes = [128, 128], strides = [1, 1]} : vector<128x145xf32> to vector<128x128xf32>
    %cst_11 = arith.constant 0.000000e+00 : f32
    %17 = vector.broadcast %cst_11 : f32 to vector<128x128xf32>
    %18 = arith.maximumf %16, %17 : vector<128x128xf32>
    %19 = arith.truncf %18 : vector<128x128xf32> to vector<128x128xbf16>
    %20 = arith.truncf %11 : vector<256x128xf32> to vector<256x128xbf16>
    %cst_12 = arith.constant dense<0.000000e+00> : vector<128x256xf32>
    %21 = tpu.matmul %19, %20, %cst_12 {dimension_numbers = #tpu.dot_dimension_numbers<[1], [1], [0], [0], [0, 0, 1, 0], [], []>} : vector<128x128xbf16>, vector<256x128xbf16>, vector<128x256xf32> -> vector<128x256xf32>
    %cst_13 = arith.constant dense<0xFF800000> : vector<128xf32>
    %22 = vector.multi_reduction <maximumf>, %21, %cst_13 [1] : vector<128x256xf32> to vector<128xf32>
    %23 = vector.shape_cast %22 : vector<128xf32> to vector<128x1xf32>
    %24 = vector.broadcast %23 : vector<128x1xf32> to vector<128x256xf32>
    %25 = arith.subf %21, %24 : vector<128x256xf32>
    %26 = math.exp %25 : vector<128x256xf32>
    %27 = arith.truncf %26 : vector<128x256xf32> to vector<128x256xbf16>
    %28 = arith.truncf %12 : vector<256x17xf32> to vector<256x17xbf16>
    %cst_14 = arith.constant dense<0.000000e+00> : vector<128x17xf32>
    %29 = tpu.matmul %27, %28, %cst_14 {dimension_numbers = #tpu.dot_dimension_numbers<[1], [0], [0], [1], [0, 0, 1, 1], [], []>} : vector<128x256xbf16>, vector<256x17xbf16>, vector<128x17xf32> -> vector<128x17xf32>
    %30 = vector.extract_strided_slice %29 {offsets = [0, 0], sizes = [128, 16], strides = [1, 1]} : vector<128x17xf32> to vector<128x16xf32>
    %31 = vector.extract_strided_slice %29 {offsets = [0, 16], sizes = [128, 1], strides = [1, 1]} : vector<128x17xf32> to vector<128x1xf32>
    %32 = tpu.reciprocal %31 {approx = true} : vector<128x1xf32> -> vector<128x1xf32>
    %33 = vector.broadcast %32 : vector<128x1xf32> to vector<128x16xf32>
    %34 = arith.mulf %30, %33 : vector<128x16xf32>
    %c0_15 = arith.constant 0 : index
    %c0_16 = arith.constant 0 : index
    %35 = vector.load %arg6[%c0_15, %c0_16] : memref<32x16xbf16, #tpu.memory_space<vmem>>, vector<32x16xbf16>
    %36 = arith.truncf %34 : vector<128x16xf32> to vector<128x16xbf16>
    %cst_17 = arith.constant dense<0.000000e+00> : vector<32x128xf32>
    %37 = tpu.matmul %35, %36, %cst_17 {dimension_numbers = #tpu.dot_dimension_numbers<[1], [1], [0], [0], [0, 0, 1, 0], [], []>} : vector<32x16xbf16>, vector<128x16xbf16>, vector<32x128xf32> -> vector<32x128xf32>
    %c0_18 = arith.constant 0 : index
    %c0_19 = arith.constant 0 : index
    %38 = vector.load %arg7[%c0_18, %c0_19] : memref<32x1xf32, #tpu.memory_space<vmem>>, vector<32x1xf32>
    %39 = vector.broadcast %38 : vector<32x1xf32> to vector<32x128xf32>
    %40 = arith.addf %37, %39 : vector<32x128xf32>
    %cst_20 = arith.constant 0.000000e+00 : f32
    %41 = vector.broadcast %cst_20 : f32 to vector<32x128xf32>
    %42 = arith.maximumf %40, %41 : vector<32x128xf32>
    %c0_21 = arith.constant 0 : index
    %c0_22 = arith.constant 0 : index
    %c0_23 = arith.constant 0 : index
    %43 = vector.load %arg8[%c0_21, %c0_22, %c0_23] : memref<1x32x128xf32, #tpu.memory_space<vmem>>, vector<1x32x128xf32>
    %44 = vector.shape_cast %43 : vector<1x32x128xf32> to vector<32x128xf32>
    %45 = vector.shape_cast %42 : vector<32x128xf32> to vector<1x32x128xf32>
    tpu.vector_store %arg8[%c0_21, %c0_22, %c0_23], %45 {strides = array<i32>} : memref<1x32x128xf32, #tpu.memory_space<vmem>>, vector<1x32x128xf32>,
    return
  }
  func.func @transform_0(%arg0: i32, %arg1: i32) -> (i32, i32, i32) {
    %c0_i32 = arith.constant 0 : i32
    %c0_i32_0 = arith.constant 0 : i32
    %c0_i32_1 = arith.constant 0 : i32
    return %arg0, %c0_i32, %c0_i32_0 : i32, i32, i32
  }
  func.func @transform_1(%arg0: i32, %arg1: i32) -> (i32, i32, i32) {
    %c0_i32 = arith.constant 0 : i32
    %c0_i32_0 = arith.constant 0 : i32
    return %arg0, %arg1, %c0_i32 : i32, i32, i32
  }
  func.func @transform_2(%arg0: i32, %arg1: i32) -> (i32, i32) {
    %c0_i32 = arith.constant 0 : i32
    %c0_i32_0 = arith.constant 0 : i32
    %c0_i32_1 = arith.constant 0 : i32
    return %c0_i32, %c0_i32_0 : i32, i32
  }
  func.func @transform_3(%arg0: i32, %arg1: i32) -> (i32, i32) {
    %c0_i32 = arith.constant 0 : i32
    %c0_i32_0 = arith.constant 0 : i32
    %c0_i32_1 = arith.constant 0 : i32
    return %c0_i32, %c0_i32_0 : i32, i32
  }
  func.func @transform_4(%arg0: i32, %arg1: i32) -> (i32, i32) {
    %c0_i32 = arith.constant 0 : i32
    %c0_i32_0 = arith.constant 0 : i32
    %c0_i32_1 = arith.constant 0 : i32
    return %c0_i32, %c0_i32_0 : i32, i32
  }
  func.func @transform_5(%arg0: i32, %arg1: i32) -> (i32, i32) {
    %c0_i32 = arith.constant 0 : i32
    %c0_i32_0 = arith.constant 0 : i32
    %c0_i32_1 = arith.constant 0 : i32
    return %c0_i32, %c0_i32_0 : i32, i32
  }
  func.func @transform_6(%arg0: i32, %arg1: i32) -> (i32, i32, i32) {
    %c0_i32 = arith.constant 0 : i32
    %c0_i32_0 = arith.constant 0 : i32
    return %arg0, %c0_i32, %arg1 : i32, i32, i32
  }
}

</mosaic_0001>

<llo_original>
// kernel: tpu_custom_call.1
$region0: #{tpu_custom_call.1}
  #allocation0 [shape = 'u32[]', space=smem, size = 0x4, offset = 0x4, fixed_abs, tag = 'smem constant byte address 0x4 - core index']
  #allocation1 [shape = 'u32[144,128]{1,0:T(1,128)}', space=vmem, size = 0x12000, scoped, tag = 'internal scratch']
  %s0 = inlined_call_operand.vmem [shape: bf16[2,256,32], index: 0, kind: input, shape index: {}]
  %s1 = inlined_call_operand.vmem [shape: bf16[2,256,32], index: 1, kind: input, shape index: {}]
  %s2 = inlined_call_operand.vmem [shape: bf16[32,145], index: 2, kind: input, shape index: {}]
  %s3 = inlined_call_operand.vmem [shape: f32[1,145], index: 3, kind: input, shape index: {}]
  %s4 = inlined_call_operand.vmem [shape: bf16[32,16], index: 4, kind: input, shape index: {}]
  %s5 = inlined_call_operand.vmem [shape: f32[32,1], index: 5, kind: input, shape index: {}]
  %s6 = inlined_call_operand.hbm [shape: f32[2,32,256], index: 6, kind: output, shape index: {}]
  %s7 = sld [smem:[#allocation0]]
  $region57: #{tpu_custom_call.1} parent=0
    _
  %s9 = ssub.s32 1, %s7
  %s10 = scalar_select 0, %s9, %s7
  $region1: #{tpu_custom_call.1} parent=0
    #allocation2 [shape = 'u8[32768]{0}', space=vmem, size = 0x8000, scoped, tag = 'output window, operand 0']
    #allocation3 [shape = 's32[2]{0}', space=sflag, size = 0x8, scoped, tag = 'scoped memory for tpu_custom_call.1']
    %11 = vsyncpa [#allocation3], 0
    %s12 = scalar_lea.sflag [#allocation3], 1
    %13 = vsyncpa %s12, 0
    loop: start=0, step=1, limit=6
    $region2: #{tpu_custom_call.1} parent=1 // loop_pre_header
      _
    $region3: #{tpu_custom_call.1} parent=1 // loop_header
      %s15 = sphi 0, %s19
      %p16 = scmp.ge.s32.totalorder %s15, 6
      %s22 = sphi 0, %s34
      %s23 = sphi 0, %s30
      %s24 = sphi 0, %s22
      %s25 = sphi 0, %s23
      %s26 = sphi 0, %s24
      %s27 = sphi 0, %s25
      %s37 = sphi 0, %s39
      %s40 = sphi 0, %s37
      %s41 = sphi 0, %s40
      %s57 = sphi 0, %s41
      %s65 = sphi 0, %s67
      %s68 = sphi 0, %s65
      %s69 = sphi 0, %s68
      %s85 = sphi 0, %s69
      %s89 = sphi 0, %s89
      %s91 = sphi 0, %s89
      %s92 = sphi 0, %s91
      %s106 = sphi 0, %s92
      %s110 = sphi 0, %s110
      %s112 = sphi 0, %s110
      %s113 = sphi 0, %s112
      %s127 = sphi 0, %s113
      %s131 = sphi 0, %s131
      %s133 = sphi 0, %s131
      %s134 = sphi 0, %s133
      %s148 = sphi 0, %s134
      %s152 = sphi 0, %s152
      %s154 = sphi 0, %s152
      %s155 = sphi 0, %s154
      %s169 = sphi 0, %s155
      %s177 = sphi 0, %s179
      %s180 = sphi 0, %s177
      %s181 = sphi 0, %s180
      %s197 = sphi 0, %s181
    $region4: #{tpu_custom_call.1} parent=1 // loop_header_branch
      %18 = sbr.rel (%p16) target = $region8
    $region5: #{tpu_custom_call.1} parent=1 // loop_body
      %s20 = ssub.s32 %s15, 1
      %s21 = ssub.s32 %s15, 2
      %s28 = sadd.s32 1, %s23
      %p29 = scmp.ge.s32.totalorder %s28, 2
      %s30 = scalar_select %p29, 0, %s28
      %s31 = sadd.s32 1, %s22
      %s32 = scalar_select %p29, %s31, %s22
      %p33 = scmp.ge.s32.totalorder %s32, 2
      %s34 = scalar_select %p33, 0, %s32
      %s35 = ssub.s32 %s22, %s34
      %p36 = scmp.eq.s32.totalorder %s35, 0
      %s38 = sadd.s32 %s37, 1
      %s39 = scalar_select %p36, %s37, %s38
      %p42 = pneg %p36
      %p43 = scmp.eq.s32.totalorder %s15, 3
      %p44 = por %p42, %p43
      %p45 = scmp.ne.s32.totalorder %s37, %s40
      %p46 = scmp.eq.s32.totalorder %s15, 0
      %p47 = por %p45, %p46
      %p48 = scmp.ne.s32.totalorder %s37, %s40
      %p49 = scmp.eq.s32.totalorder %s20, 3
      %p50 = por %p48, %p49
      %p51 = scmp.ne.s32.totalorder %s40, %s41
      %p52 = scmp.eq.s32.totalorder %s20, 0
      %p53 = por %p51, %p52
      %p54 = scmp.ne.s32.totalorder %s40, %s41
      %p55 = scmp.eq.s32.totalorder %s21, 3
      %p56 = por %p54, %p55
      %p58 = scmp.ne.s32.totalorder %s41, %s57
      %p59 = scmp.eq.s32.totalorder %s21, 0
      %p60 = por %p58, %p59
      %s61 = ssub.s32 %s22, %s34
      %s62 = ssub.s32 %s23, %s30
      %s63 = sor.u32 %s61, %s62
      %p64 = scmp.eq.s32.totalorder %s63, 0
      %s66 = sadd.s32 %s65, 1
      %s67 = scalar_select %p64, %s65, %s66
      %p70 = pneg %p64
      %p71 = scmp.eq.s32.totalorder %s15, 3
      %p72 = por %p70, %p71
      %p73 = scmp.ne.s32.totalorder %s65, %s68
      %p74 = scmp.eq.s32.totalorder %s15, 0
      %p75 = por %p73, %p74
      %p76 = scmp.ne.s32.totalorder %s65, %s68
      %p77 = scmp.eq.s32.totalorder %s20, 3
      %p78 = por %p76, %p77
      %p79 = scmp.ne.s32.totalorder %s68, %s69
      %p80 = scmp.eq.s32.totalorder %s20, 0
      %p81 = por %p79, %p80
      %p82 = scmp.ne.s32.totalorder %s68, %s69
      %p83 = scmp.eq.s32.totalorder %s21, 3
      %p84 = por %p82, %p83
      %p86 = scmp.ne.s32.totalorder %s69, %s85
      %p87 = scmp.eq.s32.totalorder %s21, 0
      %p88 = por %p86, %p87
      %s90 = sadd.s32 %s89, 1
      %p93 = scmp.eq.s32.totalorder %s15, 3
      %p94 = scmp.ne.s32.totalorder %s89, %s91
      %p95 = scmp.eq.s32.totalorder %s15, 0
      %p96 = por %p94, %p95
      %p97 = scmp.ne.s32.totalorder %s89, %s91
      %p98 = scmp.eq.s32.totalorder %s20, 3
      %p99 = por %p97, %p98
      %p100 = scmp.ne.s32.totalorder %s91, %s92
      %p101 = scmp.eq.s32.totalorder %s20, 0
      %p102 = por %p100, %p101
      %p103 = scmp.ne.s32.totalorder %s91, %s92
      %p104 = scmp.eq.s32.totalorder %s21, 3
      %p105 = por %p103, %p104
      %p107 = scmp.ne.s32.totalorder %s92, %s106
      %p108 = scmp.eq.s32.totalorder %s21, 0
      %p109 = por %p107, %p108
      %s111 = sadd.s32 %s110, 1
      %p114 = scmp.eq.s32.totalorder %s15, 3
      %p115 = scmp.ne.s32.totalorder %s110, %s112
      %p116 = scmp.eq.s32.totalorder %s15, 0
      %p117 = por %p115, %p116
      %p118 = scmp.ne.s32.totalorder %s110, %s112
      %p119 = scmp.eq.s32.totalorder %s20, 3
      %p120 = por %p118, %p119
      %p121 = scmp.ne.s32.totalorder %s112, %s113
      %p122 = scmp.eq.s32.totalorder %s20, 0
      %p123 = por %p121, %p122
      %p124 = scmp.ne.s32.totalorder %s112, %s113
      %p125 = scmp.eq.s32.totalorder %s21, 3
      %p126 = por %p124, %p125
      %p128 = scmp.ne.s32.totalorder %s113, %s127
      %p129 = scmp.eq.s32.totalorder %s21, 0
      %p130 = por %p128, %p129
      %s132 = sadd.s32 %s131, 1
      %p135 = scmp.eq.s32.totalorder %s15, 3
      %p136 = scmp.ne.s32.totalorder %s131, %s133
      %p137 = scmp.eq.s32.totalorder %s15, 0
      %p138 = por %p136, %p137
      %p139 = scmp.ne.s32.totalorder %s131, %s133
      %p140 = scmp.eq.s32.totalorder %s20, 3
      %p141 = por %p139, %p140
      %p142 = scmp.ne.s32.totalorder %s133, %s134
      %p143 = scmp.eq.s32.totalorder %s20, 0
      %p144 = por %p142, %p143
      %p145 = scmp.ne.s32.totalorder %s133, %s134
      %p146 = scmp.eq.s32.totalorder %s21, 3
      %p147 = por %p145, %p146
      %p149 = scmp.ne.s32.totalorder %s134, %s148
      %p150 = scmp.eq.s32.totalorder %s21, 0
      %p151 = por %p149, %p150
      %s153 = sadd.s32 %s152, 1
      %p156 = scmp.eq.s32.totalorder %s15, 3
      %p157 = scmp.ne.s32.totalorder %s152, %s154
      %p158 = scmp.eq.s32.totalorder %s15, 0
      %p159 = por %p157, %p158
      %p160 = scmp.ne.s32.totalorder %s152, %s154
      %p161 = scmp.eq.s32.totalorder %s20, 3
      %p162 = por %p160, %p161
      %p163 = scmp.ne.s32.totalorder %s154, %s155
      %p164 = scmp.eq.s32.totalorder %s20, 0
      %p165 = por %p163, %p164
      %p166 = scmp.ne.s32.totalorder %s154, %s155
      %p167 = scmp.eq.s32.totalorder %s21, 3
      %p168 = por %p166, %p167
      %p170 = scmp.ne.s32.totalorder %s155, %s169
      %p171 = scmp.eq.s32.totalorder %s21, 0
      %p172 = por %p170, %p171
      %s173 = ssub.s32 %s22, %s34
      %s174 = ssub.s32 %s23, %s30
      %s175 = sor.u32 %s173, %s174
      %p176 = scmp.eq.s32.totalorder %s175, 0
      %s178 = sadd.s32 %s177, 1
      %s179 = scalar_select %p176, %s177, %s178
      %p182 = pneg %p176
      %p183 = scmp.eq.s32.totalorder %s15, 3
      %p184 = por %p182, %p183
      %p185 = scmp.ne.s32.totalorder %s177, %s180
      %p186 = scmp.eq.s32.totalorder %s15, 0
      %p187 = por %p185, %p186
      %p188 = scmp.ne.s32.totalorder %s177, %s180
      %p189 = scmp.eq.s32.totalorder %s20, 3
      %p190 = por %p188, %p189
      %p191 = scmp.ne.s32.totalorder %s180, %s181
      %p192 = scmp.eq.s32.totalorder %s20, 0
      %p193 = por %p191, %p192
      %p194 = scmp.ne.s32.totalorder %s180, %s181
      %p195 = scmp.eq.s32.totalorder %s21, 3
      %p196 = por %p194, %p195
      %p198 = scmp.ne.s32.totalorder %s181, %s197
      %p199 = scmp.eq.s32.totalorder %s21, 0
      %p200 = por %p198, %p199
      %p201 = scmp.le.s32.totalorder 1, %s15
      %p202 = scmp.lt.s32.totalorder %s15, 5
      %p203 = pnand %p201, %p202
      %p204 = pneg %p203
      // Predicated region
      $region9: #{tpu_custom_call.1} parent=5 // pred_check
        _
      $region10: #{tpu_custom_call.1} parent=5 // pred_check_branch
        %206 = sbr.rel (%p203) target = $region12
      $region11: #{tpu_custom_call.1} parent=5 // pred_region
        %s207 = ssub.s32 %s15, 1
        // Predicated region
        $region13: #{tpu_custom_call.1} parent=11 // pred_check
          %p208 = pneg %p102
        $region14: #{tpu_custom_call.1} parent=11 // pred_check_branch
          %210 = sbr.rel (%p208) target = $region16
        $region15: #{tpu_custom_call.1} parent=11 // pred_region
          _
        $region16: #{tpu_custom_call.1} parent=11 // pred_fallthru
          _
        // Predicated region
        $region17: #{tpu_custom_call.1} parent=11 // pred_check
          %p211 = pneg %p123
        $region18: #{tpu_custom_call.1} parent=11 // pred_check_branch
          %213 = sbr.rel (%p211) target = $region20
        $region19: #{tpu_custom_call.1} parent=11 // pred_region
          _
        $region20: #{tpu_custom_call.1} parent=11 // pred_fallthru
          _
        // Predicated region
        $region21: #{tpu_custom_call.1} parent=11 // pred_check
          %p214 = pneg %p144
        $region22: #{tpu_custom_call.1} parent=11 // pred_check_branch
          %216 = sbr.rel (%p214) target = $region24
        $region23: #{tpu_custom_call.1} parent=11 // pred_region
          _
        $region24: #{tpu_custom_call.1} parent=11 // pred_fallthru
          _
        // Predicated region
        $region25: #{tpu_custom_call.1} parent=11 // pred_check
          %p217 = pneg %p165
        $region26: #{tpu_custom_call.1} parent=11 // pred_check_branch
          %219 = sbr.rel (%p217) target = $region28
        $region27: #{tpu_custom_call.1} parent=11 // pred_region
          _
        $region28: #{tpu_custom_call.1} parent=11 // pred_fallthru
          _
      $region12: #{tpu_custom_call.1} parent=5 // pred_fallthru
        _
      %p220 = scmp.lt.s32.totalorder %s15, 4
      // Predicated region
      $region29: #{tpu_custom_call.1} parent=5 // pred_check
        %p221 = pneg %p220
      $region30: #{tpu_custom_call.1} parent=5 // pred_check_branch
        %223 = sbr.rel (%p221) target = $region32
      $region31: #{tpu_custom_call.1} parent=5 // pred_region
        // Predicated region
        $region33: #{tpu_custom_call.1} parent=31 // pred_check
          %p224 = pneg %p47
        $region34: #{tpu_custom_call.1} parent=31 // pred_check_branch
          %226 = sbr.rel (%p224) target = $region36
        $region35: #{tpu_custom_call.1} parent=31 // pred_region
          %p227 = scmp.lt.s32.totalorder %s22, 1
          %s228 = scalar_select %p227, %s22, 1
          %s229 = smul.addr %s228, 32
          %s230 = smul.addr %s229, 4
          %s231 = scalar_lea.vmem %s0, %s230
        $region36: #{tpu_custom_call.1} parent=31 // pred_fallthru
          _
        // Predicated region
        $region37: #{tpu_custom_call.1} parent=31 // pred_check
          %p232 = pneg %p75
        $region38: #{tpu_custom_call.1} parent=31 // pred_check_branch
          %234 = sbr.rel (%p232) target = $region40
        $region39: #{tpu_custom_call.1} parent=31 // pred_region
          %s235 = smul.u32 16, %s23
          %p236 = scmp.lt.s32.totalorder %s22, 1
          %s237 = scalar_select %p236, %s22, 1
          %p238 = scmp.lt.s32.totalorder %s235, 31
          %s239 = scalar_select %p238, %s235, 31
          %s240 = smul.addr %s237, 32
          %s241 = sadd.s32 %s239, %s240
          %s242 = smul.addr %s241, 4
          %s243 = scalar_lea.vmem %s1, %s242
          %s244 = smul.u32 16, %s23
        $region40: #{tpu_custom_call.1} parent=31 // pred_fallthru
          _
      $region32: #{tpu_custom_call.1} parent=5 // pred_fallthru
        _
      %p245 = scmp.le.s32.totalorder 1, %s15
      %p246 = scmp.lt.s32.totalorder %s15, 5
      %p247 = pnand %p245, %p246
      %p248 = pneg %p247
      // Predicated region
      $region41: #{tpu_custom_call.1} parent=5 // pred_check
        _
      $region42: #{tpu_custom_call.1} parent=5 // pred_check_branch
        %250 = sbr.rel (%p247) target = $region44
      $region43: #{tpu_custom_call.1} parent=5 // pred_region
        %s251 = ssub.s32 %s15, 1
        %p252 = scmp.lt.s32.totalorder %s24, 1
        %s253 = scalar_select %p252, %s24, 1
        %s254 = smul.addr %s253, 32
        %s255 = smul.addr %s254, 4
        %s256 = scalar_lea.vmem %s0, %s255
        %p257 = pneg %p53
        %p258 = pneg %p50
        %s259 = smul.u32 16, %s25
        %p260 = scmp.lt.s32.totalorder %s24, 1
        %s261 = scalar_select %p260, %s24, 1
        %p262 = scmp.lt.s32.totalorder %s259, 31
        %s263 = scalar_select %p262, %s259, 31
        %s264 = smul.addr %s261, 32
        %s265 = sadd.s32 %s263, %s264
        %s266 = smul.addr %s265, 4
        %s267 = scalar_lea.vmem %s1, %s266
        %p268 = pneg %p81
        %p269 = pneg %p78
        %p270 = pneg %p102
        %p271 = pneg %p99
        %p272 = pneg %p123
        %p273 = pneg %p120
        %p274 = pneg %p144
        %p275 = pneg %p141
        %p276 = pneg %p165
        %p277 = pneg %p162
        %p278 = pneg %p193
        %p279 = pneg %p190
        %s280 = sand.u32 %s180, 1
        %s281 = scalar_lea.sflag [#allocation3], %s280
        %s282 = sand.u32 %s180, 1
        %s283 = smul.addr %s282, 32
        %s284 = scalar_lea.vmem [#allocation2], %s283
        %p285 = scmp.lt.s32.totalorder %s24, 1
        %s286 = scalar_select %p285, %s24, 1
        %s287 = smul.addr %s286, 32
        %s288 = smul.addr %s287, 4
        %s289 = scalar_lea.vmem %s0, %s288
        %s290 = smul.u32 16, %s25
        %p291 = scmp.lt.s32.totalorder %s24, 1
        %s292 = scalar_select %p291, %s24, 1
        %p293 = scmp.lt.s32.totalorder %s290, 31
        %s294 = scalar_select %p293, %s290, 31
        %s295 = smul.addr %s292, 32
        %s296 = sadd.s32 %s294, %s295
        %s297 = smul.addr %s296, 4
        %s298 = scalar_lea.vmem %s1, %s297
        %s299 = smul.u32 16, %s25
        %v301 = vld [vmem:[%s289] sm:$0xf]
        %v302 = vld [vmem:[%s289 + $0x4] sm:$0xf]
        %v303 = vld [vmem:[%s289 + $0x8] sm:$0xf]
        %v304 = vld [vmem:[%s289 + $0xc] sm:$0xf]
        %v305 = vld [vmem:[%s289 + $0x10] sm:$0xf]
        %v306 = vld [vmem:[%s289 + $0x14] sm:$0xf]
        %v307 = vld [vmem:[%s289 + $0x18] sm:$0xf]
        %v308 = vld [vmem:[%s289 + $0x1c] sm:$0xf]
        %v309 = vld [vmem:[%s289 + $0x20] sm:$0xf]
        %v310 = vld [vmem:[%s289 + $0x24] sm:$0xf]
        %v311 = vld [vmem:[%s289 + $0x28] sm:$0xf]
        %v312 = vld [vmem:[%s289 + $0x2c] sm:$0xf]
        %v313 = vld [vmem:[%s289 + $0x30] sm:$0xf]
        %v314 = vld [vmem:[%s289 + $0x34] sm:$0xf]
        %v315 = vld [vmem:[%s289 + $0x38] sm:$0xf]
        %v316 = vld [vmem:[%s289 + $0x3c] sm:$0xf]
        %v317 = vld [vmem:[%s289 + $0x40] sm:$0xf]
        %v318 = vld [vmem:[%s289 + $0x44] sm:$0xf]
        %v319 = vld [vmem:[%s289 + $0x48] sm:$0xf]
        %v320 = vld [vmem:[%s289 + $0x4c] sm:$0xf]
        %v321 = vld [vmem:[%s289 + $0x50] sm:$0xf]
        %v322 = vld [vmem:[%s289 + $0x54] sm:$0xf]
        %v323 = vld [vmem:[%s289 + $0x58] sm:$0xf]
        %v324 = vld [vmem:[%s289 + $0x5c] sm:$0xf]
        %v325 = vld [vmem:[%s289 + $0x60] sm:$0xf]
        %v326 = vld [vmem:[%s289 + $0x64] sm:$0xf]
        %v327 = vld [vmem:[%s289 + $0x68] sm:$0xf]
        %v328 = vld [vmem:[%s289 + $0x6c] sm:$0xf]
        %v329 = vld [vmem:[%s289 + $0x70] sm:$0xf]
        %v330 = vld [vmem:[%s289 + $0x74] sm:$0xf]
        %v331 = vld [vmem:[%s289 + $0x78] sm:$0xf]
        %v332 = vld [vmem:[%s289 + $0x7c] sm:$0xf]
        %v333 = vld [vmem:[%s298] sm:$0xf]
        %v334 = vld [vmem:[%s298 + $0x4] sm:$0xf]
        %v335 = vld [vmem:[%s298 + $0x8] sm:$0xf]
        %v336 = vld [vmem:[%s298 + $0xc] sm:$0xf]
        %v337 = vld [vmem:[%s298 + $0x10] sm:$0xf]
        %v338 = vld [vmem:[%s298 + $0x14] sm:$0xf]
        %v339 = vld [vmem:[%s298 + $0x18] sm:$0xf]
        %v340 = vld [vmem:[%s298 + $0x1c] sm:$0xf]
        %v341 = vld [vmem:[%s298 + $0x20] sm:$0xf]
        %v342 = vld [vmem:[%s298 + $0x24] sm:$0xf]
        %v343 = vld [vmem:[%s298 + $0x28] sm:$0xf]
        %v344 = vld [vmem:[%s298 + $0x2c] sm:$0xf]
        %v345 = vld [vmem:[%s298 + $0x30] sm:$0xf]
        %v346 = vld [vmem:[%s298 + $0x34] sm:$0xf]
        %v347 = vld [vmem:[%s298 + $0x38] sm:$0xf]
        %v348 = vld [vmem:[%s298 + $0x3c] sm:$0xf]
        %v349 = vld [vmem:[%s2] sm:$0xff]
        %v350 = vld [vmem:[%s2 + $0x8] sm:$0xff]
        %v351 = vld [vmem:[%s2 + $0x10] sm:$0xff]
        %v352 = vld [vmem:[%s2 + $0x18] sm:$0xff]
        %v353 = vld [vmem:[%s3] sm:$0x3]
        %v355 = vlaneseq
        %v356 = vshrl.u32 %v355, 7
        %v357 = vsub.s32 0, %v356
        %v358 = vrot.slane %v353, %v357
        %v359 = vlaneseq
        %v360 = vshrl.u32 %v359, 7
        %v361 = vsub.s32 1, %v360
        %v362 = vrot.slane %v353, %v361
        %v397 = vunpack.c.l.b16 %v301
        %v398 = vunpack.c.l.b16 %v302
        %v399 = vunpack.c.l.b16 %v303
        %v400 = vunpack.c.l.b16 %v304
        %v401 = vunpack.c.l.b16 %v305
        %v402 = vunpack.c.l.b16 %v306
        %v403 = vunpack.c.l.b16 %v307
        %v404 = vunpack.c.l.b16 %v308
        %v405 = vunpack.c.l.b16 %v309
        %v406 = vunpack.c.l.b16 %v310
        %v407 = vunpack.c.l.b16 %v311
        %v408 = vunpack.c.l.b16 %v312
        %v409 = vunpack.c.l.b16 %v313
        %v410 = vunpack.c.l.b16 %v314
        %v411 = vunpack.c.l.b16 %v315
        %v412 = vunpack.c.l.b16 %v316
        %v413 = vunpack.c.l.b16 %v317
        %v414 = vunpack.c.l.b16 %v318
        %v415 = vunpack.c.l.b16 %v319
        %v416 = vunpack.c.l.b16 %v320
        %v417 = vunpack.c.l.b16 %v321
        %v418 = vunpack.c.l.b16 %v322
        %v419 = vunpack.c.l.b16 %v323
        %v420 = vunpack.c.l.b16 %v324
        %v421 = vunpack.c.l.b16 %v325
        %v422 = vunpack.c.l.b16 %v326
        %v423 = vunpack.c.l.b16 %v327
        %v424 = vunpack.c.l.b16 %v328
        %v425 = vunpack.c.l.b16 %v329
        %v426 = vunpack.c.l.b16 %v330
        %v427 = vunpack.c.l.b16 %v331
        %v428 = vunpack.c.l.b16 %v332
        %v429 = vpack.c.b16 %v398, %v397
        %v430 = vpack.c.b16 %v400, %v399
        %v431 = vpack.c.b16 %v402, %v401
        %v432 = vpack.c.b16 %v404, %v403
        %v433 = vpack.c.b16 %v406, %v405
        %v434 = vpack.c.b16 %v408, %v407
        %v435 = vpack.c.b16 %v410, %v409
        %v436 = vpack.c.b16 %v412, %v411
        %v437 = vpack.c.b16 %v414, %v413
        %v438 = vpack.c.b16 %v416, %v415
        %v439 = vpack.c.b16 %v418, %v417
        %v440 = vpack.c.b16 %v420, %v419
        %v441 = vpack.c.b16 %v422, %v421
        %v442 = vpack.c.b16 %v424, %v423
        %v443 = vpack.c.b16 %v426, %v425
        %v444 = vpack.c.b16 %v428, %v427
        %v449 = vunpack.c.l.b16 %v349
        %v450 = vunpack.c.h.b16 %v349
        %v451 = vunpack.c.l.b16 %v350
        %v452 = vunpack.c.h.b16 %v350
        %v453 = vunpack.c.l.b16 %v351
        %v454 = vunpack.c.h.b16 %v351
        %v455 = vunpack.c.l.b16 %v352
        %v456 = vunpack.c.h.b16 %v352
        %v457 = vpack.c.b16 %v451, %v449
        %v458 = vpack.c.b16 %v452, %v450
        %v459 = vpack.c.b16 %v455, %v453
        %v460 = vpack.c.b16 %v456, %v454
        %vm465 = vcmask 261120
        %v467 = vsel %vm465, %v429, 0
        %v470 = vsel %vm465, %v430, 0
        %v473 = vsel %vm465, %v431, 0
        %v476 = vsel %vm465, %v432, 0
        %v479 = vsel %vm465, %v433, 0
        %v482 = vsel %vm465, %v434, 0
        %v485 = vsel %vm465, %v435, 0
        %v488 = vsel %vm465, %v436, 0
        %v491 = vsel %vm465, %v437, 0
        %v494 = vsel %vm465, %v438, 0
        %v497 = vsel %vm465, %v439, 0
        %v500 = vsel %vm465, %v440, 0
        %v503 = vsel %vm465, %v441, 0
        %v506 = vsel %vm465, %v442, 0
        %v509 = vsel %vm465, %v443, 0
        %v512 = vsel %vm465, %v444, 0
        %514 = vmatprep.subr.bf16.mxu0 %v458
        %515 = vmatpush1.bf16.msra.mxu0 %v457
        %516 = vmatprep.subr.bf16.mxu0 %v460
        %517 = vmatpush1.bf16.msra.mxu0 %v459
        %518 = vmatprep.subr.bf16.mxu0 0
        %519 = vmatpush1.bf16.msra.mxu0 0
        %520 = vmatprep.subr.bf16.mxu0 0
        %521 = vmatpush1.bf16.msra.mxu0 0
        %522 = vmatprep.subr.bf16.mxu0 0
        %523 = vmatpush1.bf16.msra.mxu0 0
        %524 = vmatprep.subr.bf16.mxu0 0
        %525 = vmatpush1.bf16.msra.mxu0 0
        %526 = vmatprep.subr.bf16.mxu0 0
        %527 = vmatpush1.bf16.msra.mxu0 0
        %528 = vmatprep.subr.bf16.mxu0 0
        %529 = vmatpush1.bf16.msra.mxu0 0
        %530 = vmatprep.subr.bf16.mxu0 0
        %531 = vmatpush1.bf16.msra.mxu0 0
        %532 = vmatprep.subr.bf16.mxu0 0
        %533 = vmatpush1.bf16.msra.mxu0 0
        %534 = vmatprep.subr.bf16.mxu0 0
        %535 = vmatpush1.bf16.msra.mxu0 0
        %536 = vmatprep.subr.bf16.mxu0 0
        %537 = vmatpush1.bf16.msra.mxu0 0
        %538 = vmatprep.subr.bf16.mxu0 0
        %539 = vmatpush1.bf16.msra.mxu0 0
        %540 = vmatprep.subr.bf16.mxu0 0
        %541 = vmatpush1.bf16.msra.mxu0 0
        %542 = vmatprep.subr.bf16.mxu0 0
        %543 = vmatpush1.bf16.msra.mxu0 0
        %544 = vmatprep.subr.bf16.mxu0 0
        %545 = vmatpush1.bf16.msra.mxu0 0
        %546 = vmatprep.mubr.bf16.mxu0 0
        %547 = vmatmul.mubr.bf16.gmra.mrb[0].mxu0 %v467
        %v548 = vpop.f32.mrb[0].mxu0
        %v549 = vadd.f32 %v358, %v548
        %v550 = vpop.f32.mrb[0].mxu0
        %v551 = vadd.f32 %v362, %v550
        %v552 = vpop.f32.mrb[0].mxu0
        %v553 = vadd.f32 %v358, %v552
        %v554 = vpop.f32.mrb[0].mxu0
        %v555 = vadd.f32 %v362, %v554
        %556 = vmatprep.mubr.bf16.mxu0 0
        %557 = vmatmul.mubr.bf16.gmra.mrb[0].mxu0 %v470
        %v558 = vpop.f32.mrb[0].mxu0
        %v559 = vadd.f32 %v358, %v558
        %v560 = vpop.f32.mrb[0].mxu0
        %v561 = vadd.f32 %v362, %v560
        %v562 = vpop.f32.mrb[0].mxu0
        %v563 = vadd.f32 %v358, %v562
        %v564 = vpop.f32.mrb[0].mxu0
        %v565 = vadd.f32 %v362, %v564
        %566 = vmatprep.mubr.bf16.mxu0 0
        %567 = vmatmul.mubr.bf16.gmra.mrb[0].mxu0 %v473
        %v568 = vpop.f32.mrb[0].mxu0
        %v569 = vadd.f32 %v358, %v568
        %v570 = vpop.f32.mrb[0].mxu0
        %v571 = vadd.f32 %v362, %v570
        %v572 = vpop.f32.mrb[0].mxu0
        %v573 = vadd.f32 %v358, %v572
        %v574 = vpop.f32.mrb[0].mxu0
        %v575 = vadd.f32 %v362, %v574
        %576 = vmatprep.mubr.bf16.mxu0 0
        %577 = vmatmul.mubr.bf16.gmra.mrb[0].mxu0 %v476
        %v578 = vpop.f32.mrb[0].mxu0
        %v579 = vadd.f32 %v358, %v578
        %v580 = vpop.f32.mrb[0].mxu0
        %v581 = vadd.f32 %v362, %v580
        %v582 = vpop.f32.mrb[0].mxu0
        %v583 = vadd.f32 %v358, %v582
        %v584 = vpop.f32.mrb[0].mxu0
        %v585 = vadd.f32 %v362, %v584
        %586 = vmatprep.mubr.bf16.mxu0 0
        %587 = vmatmul.mubr.bf16.gmra.mrb[0].mxu0 %v479
        %v588 = vpop.f32.mrb[0].mxu0
        %v589 = vadd.f32 %v358, %v588
        %v590 = vpop.f32.mrb[0].mxu0
        %v591 = vadd.f32 %v362, %v590
        %v592 = vpop.f32.mrb[0].mxu0
        %v593 = vadd.f32 %v358, %v592
        %v594 = vpop.f32.mrb[0].mxu0
        %v595 = vadd.f32 %v362, %v594
        %596 = vmatprep.mubr.bf16.mxu0 0
        %597 = vmatmul.mubr.bf16.gmra.mrb[0].mxu0 %v482
        %v598 = vpop.f32.mrb[0].mxu0
        %v599 = vadd.f32 %v358, %v598
        %v600 = vpop.f32.mrb[0].mxu0
        %v601 = vadd.f32 %v362, %v600
        %v602 = vpop.f32.mrb[0].mxu0
        %v603 = vadd.f32 %v358, %v602
        %v604 = vpop.f32.mrb[0].mxu0
        %v605 = vadd.f32 %v362, %v604
        %606 = vmatprep.mubr.bf16.mxu0 0
        %607 = vmatmul.mubr.bf16.gmra.mrb[0].mxu0 %v485
        %v608 = vpop.f32.mrb[0].mxu0
        %v609 = vadd.f32 %v358, %v608
        %v610 = vpop.f32.mrb[0].mxu0
        %v611 = vadd.f32 %v362, %v610
        %v612 = vpop.f32.mrb[0].mxu0
        %v613 = vadd.f32 %v358, %v612
        %v614 = vpop.f32.mrb[0].mxu0
        %v615 = vadd.f32 %v362, %v614
        %616 = vmatprep.mubr.bf16.mxu0 0
        %617 = vmatmul.mubr.bf16.gmra.mrb[0].mxu0 %v488
        %v618 = vpop.f32.mrb[0].mxu0
        %v619 = vadd.f32 %v358, %v618
        %v620 = vpop.f32.mrb[0].mxu0
        %v621 = vadd.f32 %v362, %v620
        %v622 = vpop.f32.mrb[0].mxu0
        %v623 = vadd.f32 %v358, %v622
        %v624 = vpop.f32.mrb[0].mxu0
        %v625 = vadd.f32 %v362, %v624
        %626 = vmatprep.mubr.bf16.mxu0 0
        %627 = vmatmul.mubr.bf16.gmra.mrb[0].mxu0 %v491
        %v628 = vpop.f32.mrb[0].mxu0
        %v629 = vadd.f32 %v358, %v628
        %v630 = vpop.f32.mrb[0].mxu0
        %v631 = vadd.f32 %v362, %v630
        %v632 = vpop.f32.mrb[0].mxu0
        %v633 = vadd.f32 %v358, %v632
        %v634 = vpop.f32.mrb[0].mxu0
        %v635 = vadd.f32 %v362, %v634
        %636 = vmatprep.mubr.bf16.mxu0 0
        %637 = vmatmul.mubr.bf16.gmra.mrb[0].mxu0 %v494
        %v638 = vpop.f32.mrb[0].mxu0
        %v639 = vadd.f32 %v358, %v638
        %v640 = vpop.f32.mrb[0].mxu0
        %v641 = vadd.f32 %v362, %v640
        %v642 = vpop.f32.mrb[0].mxu0
        %v643 = vadd.f32 %v358, %v642
        %v644 = vpop.f32.mrb[0].mxu0
        %v645 = vadd.f32 %v362, %v644
        %646 = vmatprep.mubr.bf16.mxu0 0
        %647 = vmatmul.mubr.bf16.gmra.mrb[0].mxu0 %v497
        %v648 = vpop.f32.mrb[0].mxu0
        %v649 = vadd.f32 %v358, %v648
        %v650 = vpop.f32.mrb[0].mxu0
        %v651 = vadd.f32 %v362, %v650
        %v652 = vpop.f32.mrb[0].mxu0
        %v653 = vadd.f32 %v358, %v652
        %v654 = vpop.f32.mrb[0].mxu0
        %v655 = vadd.f32 %v362, %v654
        %656 = vmatprep.mubr.bf16.mxu0 0
        %657 = vmatmul.mubr.bf16.gmra.mrb[0].mxu0 %v500
        %v658 = vpop.f32.mrb[0].mxu0
        %v659 = vadd.f32 %v358, %v658
        %v660 = vpop.f32.mrb[0].mxu0
        %v661 = vadd.f32 %v362, %v660
        %v662 = vpop.f32.mrb[0].mxu0
        %v663 = vadd.f32 %v358, %v662
        %v664 = vpop.f32.mrb[0].mxu0
        %v665 = vadd.f32 %v362, %v664
        %666 = vmatprep.mubr.bf16.mxu0 0
        %667 = vmatmul.mubr.bf16.gmra.mrb[0].mxu0 %v503
        %v668 = vpop.f32.mrb[0].mxu0
        %v669 = vadd.f32 %v358, %v668
        %v670 = vpop.f32.mrb[0].mxu0
        %v671 = vadd.f32 %v362, %v670
        %v672 = vpop.f32.mrb[0].mxu0
        %v673 = vadd.f32 %v358, %v672
        %v674 = vpop.f32.mrb[0].mxu0
        %v675 = vadd.f32 %v362, %v674
        %676 = vmatprep.mubr.bf16.mxu0 0
        %677 = vmatmul.mubr.bf16.gmra.mrb[0].mxu0 %v506
        %v678 = vpop.f32.mrb[0].mxu0
        %v679 = vadd.f32 %v358, %v678
        %v680 = vpop.f32.mrb[0].mxu0
        %v681 = vadd.f32 %v362, %v680
        %v682 = vpop.f32.mrb[0].mxu0
        %v683 = vadd.f32 %v358, %v682
        %v684 = vpop.f32.mrb[0].mxu0
        %v685 = vadd.f32 %v362, %v684
        %686 = vmatprep.mubr.bf16.mxu0 0
        %687 = vmatmul.mubr.bf16.gmra.mrb[0].mxu0 %v509
        %v688 = vpop.f32.mrb[0].mxu0
        %v689 = vadd.f32 %v358, %v688
        %v690 = vpop.f32.mrb[0].mxu0
        %v691 = vadd.f32 %v362, %v690
        %v692 = vpop.f32.mrb[0].mxu0
        %v693 = vadd.f32 %v358, %v692
        %v694 = vpop.f32.mrb[0].mxu0
        %v695 = vadd.f32 %v362, %v694
        %696 = vmatprep.mubr.bf16.mxu0 0
        %697 = vmatmul.mubr.bf16.gmra.mrb[0].mxu0 %v512
        %v698 = vpop.f32.mrb[0].mxu0
        %v699 = vadd.f32 %v358, %v698
        %v700 = vpop.f32.mrb[0].mxu0
        %v701 = vadd.f32 %v362, %v700
        %v702 = vpop.f32.mrb[0].mxu0
        %v703 = vadd.f32 %v358, %v702
        %v704 = vpop.f32.mrb[0].mxu0
        %v705 = vadd.f32 %v362, %v704
        %706 = vdwg.mxu0
        %v707 = vmax.f32 %v549, 0.0
        %v708 = vmax.f32 %v553, 0.0
        %v709 = vmax.f32 %v559, 0.0
        %v710 = vmax.f32 %v563, 0.0
        %v711 = vmax.f32 %v569, 0.0
        %v712 = vmax.f32 %v573, 0.0
        %v713 = vmax.f32 %v579, 0.0
        %v714 = vmax.f32 %v583, 0.0
        %v715 = vmax.f32 %v589, 0.0
        %v716 = vmax.f32 %v593, 0.0
        %v717 = vmax.f32 %v599, 0.0
        %v718 = vmax.f32 %v603, 0.0
        %v719 = vmax.f32 %v609, 0.0
        %v720 = vmax.f32 %v613, 0.0
        %v721 = vmax.f32 %v619, 0.0
        %v722 = vmax.f32 %v623, 0.0
        %v723 = vmax.f32 %v629, 0.0
        %v724 = vmax.f32 %v633, 0.0
        %v725 = vmax.f32 %v639, 0.0
        %v726 = vmax.f32 %v643, 0.0
        %v727 = vmax.f32 %v649, 0.0
        %v728 = vmax.f32 %v653, 0.0
        %v729 = vmax.f32 %v659, 0.0
        %v730 = vmax.f32 %v663, 0.0
        %v731 = vmax.f32 %v669, 0.0
        %v732 = vmax.f32 %v673, 0.0
        %v733 = vmax.f32 %v679, 0.0
        %v734 = vmax.f32 %v683, 0.0
        %v735 = vmax.f32 %v689, 0.0
        %v736 = vmax.f32 %v693, 0.0
        %v737 = vmax.f32 %v699, 0.0
        %v738 = vmax.f32 %v703, 0.0
        %v755 = vunpack.c.l.b16 %v333
        %v756 = vunpack.c.l.b16 %v334
        %v757 = vunpack.c.l.b16 %v335
        %v758 = vunpack.c.l.b16 %v336
        %v759 = vunpack.c.l.b16 %v337
        %v760 = vunpack.c.l.b16 %v338
        %v761 = vunpack.c.l.b16 %v339
        %v762 = vunpack.c.l.b16 %v340
        %v763 = vunpack.c.l.b16 %v341
        %v764 = vunpack.c.l.b16 %v342
        %v765 = vunpack.c.l.b16 %v343
        %v766 = vunpack.c.l.b16 %v344
        %v767 = vunpack.c.l.b16 %v345
        %v768 = vunpack.c.l.b16 %v346
        %v769 = vunpack.c.l.b16 %v347
        %v770 = vunpack.c.l.b16 %v348
        %v771 = vpack.c.b16 %v756, %v755
        %v772 = vpack.c.b16 %v758, %v757
        %v773 = vpack.c.b16 %v760, %v759
        %v774 = vpack.c.b16 %v762, %v761
        %v775 = vpack.c.b16 %v764, %v763
        %v776 = vpack.c.b16 %v766, %v765
        %v777 = vpack.c.b16 %v768, %v767
        %v778 = vpack.c.b16 %v770, %v769
        %v780 = vsel %vm465, %v771, 0
        %v783 = vsel %vm465, %v772, 0
        %v786 = vsel %vm465, %v773, 0
        %v789 = vsel %vm465, %v774, 0
        %v792 = vsel %vm465, %v775, 0
        %v795 = vsel %vm465, %v776, 0
        %v798 = vsel %vm465, %v777, 0
        %v801 = vsel %vm465, %v778, 0
        %803 = vmatprep.subr.bf16.mxu0 %v458
        %804 = vmatpush1.bf16.msra.mxu0 %v457
        %805 = vmatprep.subr.bf16.mxu0 %v460
        %806 = vmatpush1.bf16.msra.mxu0 %v459
        %807 = vmatprep.subr.bf16.mxu0 0
        %808 = vmatpush1.bf16.msra.mxu0 0
        %809 = vmatprep.subr.bf16.mxu0 0
        %810 = vmatpush1.bf16.msra.mxu0 0
        %811 = vmatprep.subr.bf16.mxu0 0
        %812 = vmatpush1.bf16.msra.mxu0 0
        %813 = vmatprep.subr.bf16.mxu0 0
        %814 = vmatpush1.bf16.msra.mxu0 0
        %815 = vmatprep.subr.bf16.mxu0 0
        %816 = vmatpush1.bf16.msra.mxu0 0
        %817 = vmatprep.subr.bf16.mxu0 0
        %818 = vmatpush1.bf16.msra.mxu0 0
        %819 = vmatprep.subr.bf16.mxu0 0
        %820 = vmatpush1.bf16.msra.mxu0 0
        %821 = vmatprep.subr.bf16.mxu0 0
        %822 = vmatpush1.bf16.msra.mxu0 0
        %823 = vmatprep.subr.bf16.mxu0 0
        %824 = vmatpush1.bf16.msra.mxu0 0
        %825 = vmatprep.subr.bf16.mxu0 0
        %826 = vmatpush1.bf16.msra.mxu0 0
        %827 = vmatprep.subr.bf16.mxu0 0
        %828 = vmatpush1.bf16.msra.mxu0 0
        %829 = vmatprep.subr.bf16.mxu0 0
        %830 = vmatpush1.bf16.msra.mxu0 0
        %831 = vmatprep.subr.bf16.mxu0 0
        %832 = vmatpush1.bf16.msra.mxu0 0
        %833 = vmatprep.subr.bf16.mxu0 0
        %834 = vmatpush1.bf16.msra.mxu0 0
        %835 = vmatprep.mubr.bf16.mxu0 0
        %836 = vmatmul.mubr.bf16.gmra.mrb[0].mxu0 %v780
        %v837 = vpop.f32.mrb[0].mxu0
        %v838 = vadd.f32 %v358, %v837
        %v839 = vpop.f32.mrb[0].mxu0
        %v840 = vpop.f32.mrb[0].mxu0
        %v841 = vadd.f32 %v358, %v840
        %v842 = vpop.f32.mrb[0].mxu0
        %843 = vmatprep.mubr.bf16.mxu0 0
        %844 = vmatmul.mubr.bf16.gmra.mrb[0].mxu0 %v783
        %v845 = vpop.f32.mrb[0].mxu0
        %v846 = vadd.f32 %v358, %v845
        %v847 = vpop.f32.mrb[0].mxu0
        %v848 = vpop.f32.mrb[0].mxu0
        %v849 = vadd.f32 %v358, %v848
        %v850 = vpop.f32.mrb[0].mxu0
        %851 = vmatprep.mubr.bf16.mxu0 0
        %852 = vmatmul.mubr.bf16.gmra.mrb[0].mxu0 %v786
        %v853 = vpop.f32.mrb[0].mxu0
        %v854 = vadd.f32 %v358, %v853
        %v855 = vpop.f32.mrb[0].mxu0
        %v856 = vpop.f32.mrb[0].mxu0
        %v857 = vadd.f32 %v358, %v856
        %v858 = vpop.f32.mrb[0].mxu0
        %859 = vmatprep.mubr.bf16.mxu0 0
        %860 = vmatmul.mubr.bf16.gmra.mrb[0].mxu0 %v789
        %v861 = vpop.f32.mrb[0].mxu0
        %v862 = vadd.f32 %v358, %v861
        %v863 = vpop.f32.mrb[0].mxu0
        %v864 = vpop.f32.mrb[0].mxu0
        %v865 = vadd.f32 %v358, %v864
        %v866 = vpop.f32.mrb[0].mxu0
        %867 = vmatprep.mubr.bf16.mxu0 0
        %868 = vmatmul.mubr.bf16.gmra.mrb[0].mxu0 %v792
        %v869 = vpop.f32.mrb[0].mxu0
        %v870 = vadd.f32 %v358, %v869
        %v871 = vpop.f32.mrb[0].mxu0
        %v872 = vpop.f32.mrb[0].mxu0
        %v873 = vadd.f32 %v358, %v872
        %v874 = vpop.f32.mrb[0].mxu0
        %875 = vmatprep.mubr.bf16.mxu0 0
        %876 = vmatmul.mubr.bf16.gmra.mrb[0].mxu0 %v795
        %v877 = vpop.f32.mrb[0].mxu0
        %v878 = vadd.f32 %v358, %v877
        %v879 = vpop.f32.mrb[0].mxu0
        %v880 = vpop.f32.mrb[0].mxu0
        %v881 = vadd.f32 %v358, %v880
        %v882 = vpop.f32.mrb[0].mxu0
        %883 = vmatprep.mubr.bf16.mxu0 0
        %884 = vmatmul.mubr.bf16.gmra.mrb[0].mxu0 %v798
        %v885 = vpop.f32.mrb[0].mxu0
        %v886 = vadd.f32 %v358, %v885
        %v887 = vpop.f32.mrb[0].mxu0
        %v888 = vpop.f32.mrb[0].mxu0
        %v889 = vadd.f32 %v358, %v888
        %v890 = vpop.f32.mrb[0].mxu0
        %891 = vmatprep.mubr.bf16.mxu0 0
        %892 = vmatmul.mubr.bf16.gmra.mrb[0].mxu0 %v801
        %v893 = vpop.f32.mrb[0].mxu0
        %v894 = vadd.f32 %v358, %v893
        %v895 = vpop.f32.mrb[0].mxu0
        %v896 = vpop.f32.mrb[0].mxu0
        %v897 = vadd.f32 %v358, %v896
        %v898 = vpop.f32.mrb[0].mxu0
        %899 = vdwg.mxu0
        %v900 = vmax.f32 %v838, 0.0
        %v901 = vmax.f32 %v841, 0.0
        %v902 = vmax.f32 %v846, 0.0
        %v903 = vmax.f32 %v849, 0.0
        %v904 = vmax.f32 %v854, 0.0
        %v905 = vmax.f32 %v857, 0.0
        %v906 = vmax.f32 %v862, 0.0
        %v907 = vmax.f32 %v865, 0.0
        %v908 = vmax.f32 %v870, 0.0
        %v909 = vmax.f32 %v873, 0.0
        %v910 = vmax.f32 %v878, 0.0
        %v911 = vmax.f32 %v881, 0.0
        %v912 = vmax.f32 %v886, 0.0
        %v913 = vmax.f32 %v889, 0.0
        %v914 = vmax.f32 %v894, 0.0
        %v915 = vmax.f32 %v897, 0.0
        %v916 = vpack.c.bf16 %v901, %v900
        %v917 = vpack.c.bf16 %v903, %v902
        %v918 = vpack.c.bf16 %v905, %v904
        %v919 = vpack.c.bf16 %v907, %v906
        %v920 = vpack.c.bf16 %v909, %v908
        %v921 = vpack.c.bf16 %v911, %v910
        %v922 = vpack.c.bf16 %v913, %v912
        %v923 = vpack.c.bf16 %v915, %v914
        %v924 = vpack.c.bf16 %v708, %v707
        %v925 = vpack.c.bf16 %v710, %v709
        %v926 = vpack.c.bf16 %v712, %v711
        %v927 = vpack.c.bf16 %v714, %v713
        %v928 = vpack.c.bf16 %v716, %v715
        %v929 = vpack.c.bf16 %v718, %v717
        %v930 = vpack.c.bf16 %v720, %v719
        %v931 = vpack.c.bf16 %v722, %v721
        %v932 = vpack.c.bf16 %v724, %v723
        %v933 = vpack.c.bf16 %v726, %v725
        %v934 = vpack.c.bf16 %v728, %v727
        %v935 = vpack.c.bf16 %v730, %v729
        %v936 = vpack.c.bf16 %v732, %v731
        %v937 = vpack.c.bf16 %v734, %v733
        %v938 = vpack.c.bf16 %v736, %v735
        %v939 = vpack.c.bf16 %v738, %v737
        %940 = vmatprep.subr.bf16.mxu0 0
        %941 = vmatpush1.bf16.xpose.msra.mxu0 %v924
        %942 = vmatprep.subr.bf16.mxu0 0
        %943 = vmatpush1.bf16.xpose.msra.mxu0 %v925
        %944 = vmatprep.subr.bf16.mxu0 0
        %945 = vmatpush1.bf16.xpose.msra.mxu0 %v926
        %946 = vmatprep.subr.bf16.mxu0 0
        %947 = vmatpush1.bf16.xpose.msra.mxu0 %v927
        %948 = vmatprep.subr.bf16.mxu0 0
        %949 = vmatpush1.bf16.xpose.msra.mxu0 %v928
        %950 = vmatprep.subr.bf16.mxu0 0
        %951 = vmatpush1.bf16.xpose.msra.mxu0 %v929
        %952 = vmatprep.subr.bf16.mxu0 0
        %953 = vmatpush1.bf16.xpose.msra.mxu0 %v930
        %954 = vmatprep.subr.bf16.mxu0 0
        %955 = vmatpush1.bf16.xpose.msra.mxu0 %v931
        %956 = vmatprep.subr.bf16.mxu0 0
        %957 = vmatpush1.bf16.xpose.msra.mxu0 %v932
        %958 = vmatprep.subr.bf16.mxu0 0
        %959 = vmatpush1.bf16.xpose.msra.mxu0 %v933
        %960 = vmatprep.subr.bf16.mxu0 0
        %961 = vmatpush1.bf16.xpose.msra.mxu0 %v934
        %962 = vmatprep.subr.bf16.mxu0 0
        %963 = vmatpush1.bf16.xpose.msra.mxu0 %v935
        %964 = vmatprep.subr.bf16.mxu0 0
        %965 = vmatpush1.bf16.xpose.msra.mxu0 %v936
        %966 = vmatprep.subr.bf16.mxu0 0
        %967 = vmatpush1.bf16.xpose.msra.mxu0 %v937
        %968 = vmatprep.subr.bf16.mxu0 0
        %969 = vmatpush1.bf16.xpose.msra.mxu0 %v938
        %970 = vmatprep.subr.bf16.mxu0 0
        %971 = vmatpush1.bf16.xpose.msra.mxu0 %v939
        %972 = vmatprep.mubr.bf16.mxu0 0
        %973 = vmatmul.mubr.bf16.gmra.mrb[0].mxu0 %v916
        %v974 = vpop.f32.mrb[0].mxu0
        %v975 = vadd.f32 0.0, %v974
        %v976 = vpop.f32.mrb[0].mxu0
        %v977 = vadd.f32 0.0, %v976
        %v978 = vpop.f32.mrb[0].mxu0
        %v979 = vadd.f32 0.0, %v978
        %v980 = vpop.f32.mrb[0].mxu0
        %v981 = vadd.f32 0.0, %v980
        %982 = vmatprep.mubr.bf16.mxu0 0
        %983 = vmatmul.mubr.bf16.gmra.mrb[0].mxu0 %v917
        %v984 = vpop.f32.mrb[0].mxu0
        %v985 = vadd.f32 0.0, %v984
        %v986 = vpop.f32.mrb[0].mxu0
        %v987 = vadd.f32 0.0, %v986
        %v988 = vpop.f32.mrb[0].mxu0
        %v989 = vadd.f32 0.0, %v988
        %v990 = vpop.f32.mrb[0].mxu0
        %v991 = vadd.f32 0.0, %v990
        %992 = vmatprep.mubr.bf16.mxu0 0
        %993 = vmatmul.mubr.bf16.gmra.mrb[0].mxu0 %v918
        %v994 = vpop.f32.mrb[0].mxu0
        %v995 = vadd.f32 0.0, %v994
        %v996 = vpop.f32.mrb[0].mxu0
        %v997 = vadd.f32 0.0, %v996
        %v998 = vpop.f32.mrb[0].mxu0
        %v999 = vadd.f32 0.0, %v998
        %v1000 = vpop.f32.mrb[0].mxu0
        %v1001 = vadd.f32 0.0, %v1000
        %1002 = vmatprep.mubr.bf16.mxu0 0
        %1003 = vmatmul.mubr.bf16.gmra.mrb[0].mxu0 %v919
        %v1004 = vpop.f32.mrb[0].mxu0
        %v1005 = vadd.f32 0.0, %v1004
        %v1006 = vpop.f32.mrb[0].mxu0
        %v1007 = vadd.f32 0.0, %v1006
        %v1008 = vpop.f32.mrb[0].mxu0
        %v1009 = vadd.f32 0.0, %v1008
        %v1010 = vpop.f32.mrb[0].mxu0
        %v1011 = vadd.f32 0.0, %v1010
        %1012 = vmatprep.mubr.bf16.mxu0 0
        %1013 = vmatmul.mubr.bf16.gmra.mrb[0].mxu0 %v920
        %v1014 = vpop.f32.mrb[0].mxu0
        %v1015 = vadd.f32 0.0, %v1014
        %v1016 = vpop.f32.mrb[0].mxu0
        %v1017 = vadd.f32 0.0, %v1016
        %v1018 = vpop.f32.mrb[0].mxu0
        %v1019 = vadd.f32 0.0, %v1018
        %v1020 = vpop.f32.mrb[0].mxu0
        %v1021 = vadd.f32 0.0, %v1020
        %1022 = vmatprep.mubr.bf16.mxu0 0
        %1023 = vmatmul.mubr.bf16.gmra.mrb[0].mxu0 %v921
        %v1024 = vpop.f32.mrb[0].mxu0
        %v1025 = vadd.f32 0.0, %v1024
        %v1026 = vpop.f32.mrb[0].mxu0
        %v1027 = vadd.f32 0.0, %v1026
        %v1028 = vpop.f32.mrb[0].mxu0
        %v1029 = vadd.f32 0.0, %v1028
        %v1030 = vpop.f32.mrb[0].mxu0
        %v1031 = vadd.f32 0.0, %v1030
        %1032 = vmatprep.mubr.bf16.mxu0 0
        %1033 = vmatmul.mubr.bf16.gmra.mrb[0].mxu0 %v922
        %v1034 = vpop.f32.mrb[0].mxu0
        %v1035 = vadd.f32 0.0, %v1034
        %v1036 = vpop.f32.mrb[0].mxu0
        %v1037 = vadd.f32 0.0, %v1036
        %v1038 = vpop.f32.mrb[0].mxu0
        %v1039 = vadd.f32 0.0, %v1038
        %v1040 = vpop.f32.mrb[0].mxu0
        %v1041 = vadd.f32 0.0, %v1040
        %1042 = vmatprep.mubr.bf16.mxu0 0
        %1043 = vmatmul.mubr.bf16.gmra.mrb[0].mxu0 %v923
        %v1044 = vpop.f32.mrb[0].mxu0
        %v1045 = vadd.f32 0.0, %v1044
        %v1046 = vpop.f32.mrb[0].mxu0
        %v1047 = vadd.f32 0.0, %v1046
        %v1048 = vpop.f32.mrb[0].mxu0
        %v1049 = vadd.f32 0.0, %v1048
        %v1050 = vpop.f32.mrb[0].mxu0
        %v1051 = vadd.f32 0.0, %v1050
        %1052 = vdwg.mxu0
        %v1053 = vmax.f32 %v975, %v977
        %1054 = vmax.xlane.f32.xlu0 %v1053
        %v1055 = vpop.xlane.xlu0 %1054
        %v1056 = vmax.f32 %v979, %v981
        %1057 = vmax.xlane.f32.xlu0 %v1056
        %v1058 = vpop.xlane.xlu0 %1057
        %v1059 = vmax.f32 %v985, %v987
        %1060 = vmax.xlane.f32.xlu0 %v1059
        %v1061 = vpop.xlane.xlu0 %1060
        %v1062 = vmax.f32 %v989, %v991
        %1063 = vmax.xlane.f32.xlu0 %v1062
        %v1064 = vpop.xlane.xlu0 %1063
        %v1065 = vmax.f32 %v995, %v997
        %1066 = vmax.xlane.f32.xlu0 %v1065
        %v1067 = vpop.xlane.xlu0 %1066
        %v1068 = vmax.f32 %v999, %v1001
        %1069 = vmax.xlane.f32.xlu0 %v1068
        %v1070 = vpop.xlane.xlu0 %1069
        %v1071 = vmax.f32 %v1005, %v1007
        %1072 = vmax.xlane.f32.xlu0 %v1071
        %v1073 = vpop.xlane.xlu0 %1072
        %v1074 = vmax.f32 %v1009, %v1011
        %1075 = vmax.xlane.f32.xlu0 %v1074
        %v1076 = vpop.xlane.xlu0 %1075
        %v1077 = vmax.f32 %v1015, %v1017
        %1078 = vmax.xlane.f32.xlu0 %v1077
        %v1079 = vpop.xlane.xlu0 %1078
        %v1080 = vmax.f32 %v1019, %v1021
        %1081 = vmax.xlane.f32.xlu0 %v1080
        %v1082 = vpop.xlane.xlu0 %1081
        %v1083 = vmax.f32 %v1025, %v1027
        %1084 = vmax.xlane.f32.xlu0 %v1083
        %v1085 = vpop.xlane.xlu0 %1084
        %v1086 = vmax.f32 %v1029, %v1031
        %1087 = vmax.xlane.f32.xlu0 %v1086
        %v1088 = vpop.xlane.xlu0 %1087
        %v1089 = vmax.f32 %v1035, %v1037
        %1090 = vmax.xlane.f32.xlu0 %v1089
        %v1091 = vpop.xlane.xlu0 %1090
        %v1092 = vmax.f32 %v1039, %v1041
        %1093 = vmax.xlane.f32.xlu0 %v1092
        %v1094 = vpop.xlane.xlu0 %1093
        %v1095 = vmax.f32 %v1045, %v1047
        %1096 = vmax.xlane.f32.xlu0 %v1095
        %v1097 = vpop.xlane.xlu0 %1096
        %v1098 = vmax.f32 %v1049, %v1051
        %1099 = vmax.xlane.f32.xlu0 %v1098
        %v1100 = vpop.xlane.xlu0 %1099
        %v1101 = vsub.f32 %v975, %v1055
        %v1102 = vsub.f32 %v977, %v1055
        %v1103 = vsub.f32 %v979, %v1058
        %v1104 = vsub.f32 %v981, %v1058
        %v1105 = vsub.f32 %v985, %v1061
        %v1106 = vsub.f32 %v987, %v1061
        %v1107 = vsub.f32 %v989, %v1064
        %v1108 = vsub.f32 %v991, %v1064
        %v1109 = vsub.f32 %v995, %v1067
        %v1110 = vsub.f32 %v997, %v1067
        %v1111 = vsub.f32 %v999, %v1070
        %v1112 = vsub.f32 %v1001, %v1070
        %v1113 = vsub.f32 %v1005, %v1073
        %v1114 = vsub.f32 %v1007, %v1073
        %v1115 = vsub.f32 %v1009, %v1076
        %v1116 = vsub.f32 %v1011, %v1076
        %v1117 = vsub.f32 %v1015, %v1079
        %v1118 = vsub.f32 %v1017, %v1079
        %v1119 = vsub.f32 %v1019, %v1082
        %v1120 = vsub.f32 %v1021, %v1082
        %v1121 = vsub.f32 %v1025, %v1085
        %v1122 = vsub.f32 %v1027, %v1085
        %v1123 = vsub.f32 %v1029, %v1088
        %v1124 = vsub.f32 %v1031, %v1088
        %v1125 = vsub.f32 %v1035, %v1091
        %v1126 = vsub.f32 %v1037, %v1091
        %v1127 = vsub.f32 %v1039, %v1094
        %v1128 = vsub.f32 %v1041, %v1094
        %v1129 = vsub.f32 %v1045, %v1097
        %v1130 = vsub.f32 %v1047, %v1097
        %v1131 = vsub.f32 %v1049, %v1100
        %v1132 = vsub.f32 %v1051, %v1100
        %v1133 = vmul.f32 %v1101, 1.442695
        %v1134 = vpow.pop %v1133
        %v1135 = vmul.f32 %v1102, 1.442695
        %v1136 = vpow.pop %v1135
        %v1137 = vmul.f32 %v1103, 1.442695
        %v1138 = vpow.pop %v1137
        %v1139 = vmul.f32 %v1104, 1.442695
        %v1140 = vpow.pop %v1139
        %v1141 = vmul.f32 %v1105, 1.442695
        %v1142 = vpow.pop %v1141
        %v1143 = vmul.f32 %v1106, 1.442695
        %v1144 = vpow.pop %v1143
        %v1145 = vmul.f32 %v1107, 1.442695
        %v1146 = vpow.pop %v1145
        %v1147 = vmul.f32 %v1108, 1.442695
        %v1148 = vpow.pop %v1147
        %v1149 = vmul.f32 %v1109, 1.442695
        %v1150 = vpow.pop %v1149
        %v1151 = vmul.f32 %v1110, 1.442695
        %v1152 = vpow.pop %v1151
        %v1153 = vmul.f32 %v1111, 1.442695
        %v1154 = vpow.pop %v1153
        %v1155 = vmul.f32 %v1112, 1.442695
        %v1156 = vpow.pop %v1155
        %v1157 = vmul.f32 %v1113, 1.442695
        %v1158 = vpow.pop %v1157
        %v1159 = vmul.f32 %v1114, 1.442695
        %v1160 = vpow.pop %v1159
        %v1161 = vmul.f32 %v1115, 1.442695
        %v1162 = vpow.pop %v1161
        %v1163 = vmul.f32 %v1116, 1.442695
        %v1164 = vpow.pop %v1163
        %v1165 = vmul.f32 %v1117, 1.442695
        %v1166 = vpow.pop %v1165
        %v1167 = vmul.f32 %v1118, 1.442695
        %v1168 = vpow.pop %v1167
        %v1169 = vmul.f32 %v1119, 1.442695
        %v1170 = vpow.pop %v1169
        %v1171 = vmul.f32 %v1120, 1.442695
        %v1172 = vpow.pop %v1171
        %v1173 = vmul.f32 %v1121, 1.442695
        %v1174 = vpow.pop %v1173
        %v1175 = vmul.f32 %v1122, 1.442695
        %v1176 = vpow.pop %v1175
        %v1177 = vmul.f32 %v1123, 1.442695
        %v1178 = vpow.pop %v1177
        %v1179 = vmul.f32 %v1124, 1.442695
        %v1180 = vpow.pop %v1179
        %v1181 = vmul.f32 %v1125, 1.442695
        %v1182 = vpow.pop %v1181
        %v1183 = vmul.f32 %v1126, 1.442695
        %v1184 = vpow.pop %v1183
        %v1185 = vmul.f32 %v1127, 1.442695
        %v1186 = vpow.pop %v1185
        %v1187 = vmul.f32 %v1128, 1.442695
        %v1188 = vpow.pop %v1187
        %v1189 = vmul.f32 %v1129, 1.442695
        %v1190 = vpow.pop %v1189
        %v1191 = vmul.f32 %v1130, 1.442695
        %v1192 = vpow.pop %v1191
        %v1193 = vmul.f32 %v1131, 1.442695
        %v1194 = vpow.pop %v1193
        %v1195 = vmul.f32 %v1132, 1.442695
        %v1196 = vpow.pop %v1195
        %v1197 = vpack.c.bf16 %v1138, %v1134
        %v1198 = vpack.c.bf16 %v1140, %v1136
        %v1199 = vpack.c.bf16 %v1146, %v1142
        %v1200 = vpack.c.bf16 %v1148, %v1144
        %v1201 = vpack.c.bf16 %v1154, %v1150
        %v1202 = vpack.c.bf16 %v1156, %v1152
        %v1203 = vpack.c.bf16 %v1162, %v1158
        %v1204 = vpack.c.bf16 %v1164, %v1160
        %v1205 = vpack.c.bf16 %v1170, %v1166
        %v1206 = vpack.c.bf16 %v1172, %v1168
        %v1207 = vpack.c.bf16 %v1178, %v1174
        %v1208 = vpack.c.bf16 %v1180, %v1176
        %v1209 = vpack.c.bf16 %v1186, %v1182
        %v1210 = vpack.c.bf16 %v1188, %v1184
        %v1211 = vpack.c.bf16 %v1194, %v1190
        %v1212 = vpack.c.bf16 %v1196, %v1192
        %v1213 = vpack.c.bf16 %v555, %v551
        %v1214 = vpack.c.bf16 %v565, %v561
        %v1215 = vpack.c.bf16 %v575, %v571
        %v1216 = vpack.c.bf16 %v585, %v581
        %v1217 = vpack.c.bf16 %v595, %v591
        %v1218 = vpack.c.bf16 %v605, %v601
        %v1219 = vpack.c.bf16 %v615, %v611
        %v1220 = vpack.c.bf16 %v625, %v621
        %v1221 = vpack.c.bf16 %v635, %v631
        %v1222 = vpack.c.bf16 %v645, %v641
        %v1223 = vpack.c.bf16 %v655, %v651
        %v1224 = vpack.c.bf16 %v665, %v661
        %v1225 = vpack.c.bf16 %v675, %v671
        %v1226 = vpack.c.bf16 %v685, %v681
        %v1227 = vpack.c.bf16 %v695, %v691
        %v1228 = vpack.c.bf16 %v705, %v701
        %1229 = vmatprep.subr.bf16.mxu0 0
        %1230 = vmatpush1.bf16.msra.mxu0 %v1213
        %1231 = vmatprep.subr.bf16.mxu0 0
        %1232 = vmatpush1.bf16.msra.mxu0 %v1214
        %1233 = vmatprep.subr.bf16.mxu0 0
        %1234 = vmatpush1.bf16.msra.mxu0 %v1215
        %1235 = vmatprep.subr.bf16.mxu0 0
        %1236 = vmatpush1.bf16.msra.mxu0 %v1216
        %1237 = vmatprep.subr.bf16.mxu0 0
        %1238 = vmatpush1.bf16.msra.mxu0 %v1217
        %1239 = vmatprep.subr.bf16.mxu0 0
        %1240 = vmatpush1.bf16.msra.mxu0 %v1218
        %1241 = vmatprep.subr.bf16.mxu0 0
        %1242 = vmatpush1.bf16.msra.mxu0 %v1219
        %1243 = vmatprep.subr.bf16.mxu0 0
        %1244 = vmatpush1.bf16.msra.mxu0 %v1220
        %1245 = vmatprep.subr.bf16.mxu0 0
        %1246 = vmatpush1.bf16.msra.mxu0 %v1221
        %1247 = vmatprep.subr.bf16.mxu0 0
        %1248 = vmatpush1.bf16.msra.mxu0 %v1222
        %1249 = vmatprep.subr.bf16.mxu0 0
        %1250 = vmatpush1.bf16.msra.mxu0 %v1223
        %1251 = vmatprep.subr.bf16.mxu0 0
        %1252 = vmatpush1.bf16.msra.mxu0 %v1224
        %1253 = vmatprep.subr.bf16.mxu0 0
        %1254 = vmatpush1.bf16.msra.mxu0 %v1225
        %1255 = vmatprep.subr.bf16.mxu0 0
        %1256 = vmatpush1.bf16.msra.mxu0 %v1226
        %1257 = vmatprep.subr.bf16.mxu0 0
        %1258 = vmatpush1.bf16.msra.mxu0 %v1227
        %1259 = vmatprep.subr.bf16.mxu0 0
        %1260 = vmatpush1.bf16.msra.mxu0 %v1228
        %1261 = vmatprep.mubr.bf16.mxu0 %v1198
        %1262 = vmatmul.mubr.bf16.gmra.mrb[0].mxu0 %v1197
        %v1263 = vpop.f32.mrb[0].mxu0
        %v1264 = vadd.f32 0.0, %v1263
        %v1265 = vpop.f32.mrb[0].mxu0
        %v1266 = vpop.f32.mrb[0].mxu0
        %v1267 = vadd.f32 0.0, %v1266
        %v1268 = vpop.f32.mrb[0].mxu0
        %1269 = vmatprep.mubr.bf16.mxu0 %v1200
        %1270 = vmatmul.mubr.bf16.gmra.mrb[0].mxu0 %v1199
        %v1271 = vpop.f32.mrb[0].mxu0
        %v1272 = vadd.f32 0.0, %v1271
        %v1273 = vpop.f32.mrb[0].mxu0
        %v1274 = vpop.f32.mrb[0].mxu0
        %v1275 = vadd.f32 0.0, %v1274
        %v1276 = vpop.f32.mrb[0].mxu0
        %1277 = vmatprep.mubr.bf16.mxu0 %v1202
        %1278 = vmatmul.mubr.bf16.gmra.mrb[0].mxu0 %v1201
        %v1279 = vpop.f32.mrb[0].mxu0
        %v1280 = vadd.f32 0.0, %v1279
        %v1281 = vpop.f32.mrb[0].mxu0
        %v1282 = vpop.f32.mrb[0].mxu0
        %v1283 = vadd.f32 0.0, %v1282
        %v1284 = vpop.f32.mrb[0].mxu0
        %1285 = vmatprep.mubr.bf16.mxu0 %v1204
        %1286 = vmatmul.mubr.bf16.gmra.mrb[0].mxu0 %v1203
        %v1287 = vpop.f32.mrb[0].mxu0
        %v1288 = vadd.f32 0.0, %v1287
        %v1289 = vpop.f32.mrb[0].mxu0
        %v1290 = vpop.f32.mrb[0].mxu0
        %v1291 = vadd.f32 0.0, %v1290
        %v1292 = vpop.f32.mrb[0].mxu0
        %1293 = vmatprep.mubr.bf16.mxu0 %v1206
        %1294 = vmatmul.mubr.bf16.gmra.mrb[0].mxu0 %v1205
        %v1295 = vpop.f32.mrb[0].mxu0
        %v1296 = vadd.f32 0.0, %v1295
        %v1297 = vpop.f32.mrb[0].mxu0
        %v1298 = vpop.f32.mrb[0].mxu0
        %v1299 = vadd.f32 0.0, %v1298
        %v1300 = vpop.f32.mrb[0].mxu0
        %1301 = vmatprep.mubr.bf16.mxu0 %v1208
        %1302 = vmatmul.mubr.bf16.gmra.mrb[0].mxu0 %v1207
        %v1303 = vpop.f32.mrb[0].mxu0
        %v1304 = vadd.f32 0.0, %v1303
        %v1305 = vpop.f32.mrb[0].mxu0
        %v1306 = vpop.f32.mrb[0].mxu0
        %v1307 = vadd.f32 0.0, %v1306
        %v1308 = vpop.f32.mrb[0].mxu0
        %1309 = vmatprep.mubr.bf16.mxu0 %v1210
        %1310 = vmatmul.mubr.bf16.gmra.mrb[0].mxu0 %v1209
        %v1311 = vpop.f32.mrb[0].mxu0
        %v1312 = vadd.f32 0.0, %v1311
        %v1313 = vpop.f32.mrb[0].mxu0
        %v1314 = vpop.f32.mrb[0].mxu0
        %v1315 = vadd.f32 0.0, %v1314
        %v1316 = vpop.f32.mrb[0].mxu0
        %1317 = vmatprep.mubr.bf16.mxu0 %v1212
        %1318 = vmatmul.mubr.bf16.gmra.mrb[0].mxu0 %v1211
        %v1319 = vpop.f32.mrb[0].mxu0
        %v1320 = vadd.f32 0.0, %v1319
        %v1321 = vpop.f32.mrb[0].mxu0
        %v1322 = vpop.f32.mrb[0].mxu0
        %v1323 = vadd.f32 0.0, %v1322
        %v1324 = vpop.f32.mrb[0].mxu0
        %1325 = vdwg.mxu0
        %v1326 = vrcp.pop %v1264
        %v1327 = vrcp.pop %v1267
        %v1328 = vrcp.pop %v1272
        %v1329 = vrcp.pop %v1275
        %v1330 = vrcp.pop %v1280
        %v1331 = vrcp.pop %v1283
        %v1332 = vrcp.pop %v1288
        %v1333 = vrcp.pop %v1291
        %v1334 = vrcp.pop %v1296
        %v1335 = vrcp.pop %v1299
        %v1336 = vrcp.pop %v1304
        %v1337 = vrcp.pop %v1307
        %v1338 = vrcp.pop %v1312
        %v1339 = vrcp.pop %v1315
        %v1340 = vrcp.pop %v1320
        %v1341 = vrcp.pop %v1323
        %1343 = vset.pattern.permute.xlu0 16
        %1344 = vperm.xlu0 %1343, %v1326
        %v1345 = vpop.permute.xlu0 %1344
        %1348 = vset.pattern.permute.xlu0 16
        %1349 = vperm.xlu0 %1348, %v1327
        %v1350 = vpop.permute.xlu0 %1349
        %1353 = vset.pattern.permute.xlu0 16
        %1354 = vperm.xlu0 %1353, %v1328
        %v1355 = vpop.permute.xlu0 %1354
        %1358 = vset.pattern.permute.xlu0 16
        %1359 = vperm.xlu0 %1358, %v1329
        %v1360 = vpop.permute.xlu0 %1359
        %1363 = vset.pattern.permute.xlu0 16
        %1364 = vperm.xlu0 %1363, %v1330
        %v1365 = vpop.permute.xlu0 %1364
        %1368 = vset.pattern.permute.xlu0 16
        %1369 = vperm.xlu0 %1368, %v1331
        %v1370 = vpop.permute.xlu0 %1369
        %1373 = vset.pattern.permute.xlu0 16
        %1374 = vperm.xlu0 %1373, %v1332
        %v1375 = vpop.permute.xlu0 %1374
        %1378 = vset.pattern.permute.xlu0 16
        %1379 = vperm.xlu0 %1378, %v1333
        %v1380 = vpop.permute.xlu0 %1379
        %1383 = vset.pattern.permute.xlu0 16
        %1384 = vperm.xlu0 %1383, %v1334
        %v1385 = vpop.permute.xlu0 %1384
        %1388 = vset.pattern.permute.xlu0 16
        %1389 = vperm.xlu0 %1388, %v1335
        %v1390 = vpop.permute.xlu0 %1389
        %1393 = vset.pattern.permute.xlu0 16
        %1394 = vperm.xlu0 %1393, %v1336
        %v1395 = vpop.permute.xlu0 %1394
        %1398 = vset.pattern.permute.xlu0 16
        %1399 = vperm.xlu0 %1398, %v1337
        %v1400 = vpop.permute.xlu0 %1399
        %1403 = vset.pattern.permute.xlu0 16
        %1404 = vperm.xlu0 %1403, %v1338
        %v1405 = vpop.permute.xlu0 %1404
        %1408 = vset.pattern.permute.xlu0 16
        %1409 = vperm.xlu0 %1408, %v1339
        %v1410 = vpop.permute.xlu0 %1409
        %1413 = vset.pattern.permute.xlu0 16
        %1414 = vperm.xlu0 %1413, %v1340
        %v1415 = vpop.permute.xlu0 %1414
        %1418 = vset.pattern.permute.xlu0 16
        %1419 = vperm.xlu0 %1418, %v1341
        %v1420 = vpop.permute.xlu0 %1419
        %v1422 = vmul.f32 %v1264, %v1345
        %v1423 = vmul.f32 %v1267, %v1350
        %v1424 = vmul.f32 %v1272, %v1355
        %v1425 = vmul.f32 %v1275, %v1360
        %v1426 = vmul.f32 %v1280, %v1365
        %v1427 = vmul.f32 %v1283, %v1370
        %v1428 = vmul.f32 %v1288, %v1375
        %v1429 = vmul.f32 %v1291, %v1380
        %v1430 = vmul.f32 %v1296, %v1385
        %v1431 = vmul.f32 %v1299, %v1390
        %v1432 = vmul.f32 %v1304, %v1395
        %v1433 = vmul.f32 %v1307, %v1400
        %v1434 = vmul.f32 %v1312, %v1405
        %v1435 = vmul.f32 %v1315, %v1410
        %v1436 = vmul.f32 %v1320, %v1415
        %v1437 = vmul.f32 %v1323, %v1420
        %v1438 = vld [vmem:[%s4] sm:$0xf]
        %v1439 = vld [vmem:[%s4 + $0x4] sm:$0xf]
        %v1440 = vld [vmem:[%s4 + $0x8] sm:$0xf]
        %v1441 = vld [vmem:[%s4 + $0xc] sm:$0xf]
        %v1442 = vpack.c.bf16 %v1423, %v1422
        %v1443 = vpack.c.bf16 %v1425, %v1424
        %v1444 = vpack.c.bf16 %v1427, %v1426
        %v1445 = vpack.c.bf16 %v1429, %v1428
        %v1446 = vpack.c.bf16 %v1431, %v1430
        %v1447 = vpack.c.bf16 %v1433, %v1432
        %v1448 = vpack.c.bf16 %v1435, %v1434
        %v1449 = vpack.c.bf16 %v1437, %v1436
        %v1450 = vld [vmem:[%s5] sm:$0xff]
        %v1451 = vld [vmem:[%s5 + $0x8] sm:$0xff]
        %v1452 = vld [vmem:[%s5 + $0x10] sm:$0xff]
        %v1453 = vld [vmem:[%s5 + $0x18] sm:$0xff]
        %1455 = vset.pattern.permute.xlu0 0
        %1456 = vperm.xlu0 %1455, %v1450
        %v1457 = vpop.permute.xlu0 %1456
        %1460 = vset.pattern.permute.xlu0 0
        %1461 = vperm.xlu0 %1460, %v1451
        %v1462 = vpop.permute.xlu0 %1461
        %1465 = vset.pattern.permute.xlu0 0
        %1466 = vperm.xlu0 %1465, %v1452
        %v1467 = vpop.permute.xlu0 %1466
        %1470 = vset.pattern.permute.xlu0 0
        %1471 = vperm.xlu0 %1470, %v1453
        %v1472 = vpop.permute.xlu0 %1471
        %v1478 = vunpack.c.l.b16 %v1438
        %v1479 = vunpack.c.l.b16 %v1439
        %v1480 = vunpack.c.l.b16 %v1440
        %v1481 = vunpack.c.l.b16 %v1441
        %v1482 = vpack.c.b16 %v1479, %v1478
        %v1483 = vpack.c.b16 %v1481, %v1480
        %vm1484 = vcmask 130048
        %v1486 = vsel %vm1484, %v1482, 0
        %v1489 = vsel %vm1484, %v1483, 0
        %v1492 = vsel %vm1484, %v1442, 0
        %v1495 = vsel %vm1484, %v1443, 0
        %v1498 = vsel %vm1484, %v1444, 0
        %v1501 = vsel %vm1484, %v1445, 0
        %v1504 = vsel %vm1484, %v1446, 0
        %v1507 = vsel %vm1484, %v1447, 0
        %v1510 = vsel %vm1484, %v1448, 0
        %v1513 = vsel %vm1484, %v1449, 0
        %1515 = vmatprep.subr.bf16.mxu0 0
        %1516 = vmatpush1.bf16.xpose.msra.mxu0 %v1492
        %1517 = vmatprep.subr.bf16.mxu0 0
        %1518 = vmatpush1.bf16.xpose.msra.mxu0 %v1495
        %1519 = vmatprep.subr.bf16.mxu0 0
        %1520 = vmatpush1.bf16.xpose.msra.mxu0 %v1498
        %1521 = vmatprep.subr.bf16.mxu0 0
        %1522 = vmatpush1.bf16.xpose.msra.mxu0 %v1501
        %1523 = vmatprep.subr.bf16.mxu0 0
        %1524 = vmatpush1.bf16.xpose.msra.mxu0 %v1504
        %1525 = vmatprep.subr.bf16.mxu0 0
        %1526 = vmatpush1.bf16.xpose.msra.mxu0 %v1507
        %1527 = vmatprep.subr.bf16.mxu0 0
        %1528 = vmatpush1.bf16.xpose.msra.mxu0 %v1510
        %1529 = vmatprep.subr.bf16.mxu0 0
        %1530 = vmatpush1.bf16.xpose.msra.mxu0 %v1513
        %1531 = vmatprep.subr.bf16.mxu0 0
        %1532 = vmatpush1.bf16.xpose.msra.mxu0 0
        %1533 = vmatprep.subr.bf16.mxu0 0
        %1534 = vmatpush1.bf16.xpose.msra.mxu0 0
        %1535 = vmatprep.subr.bf16.mxu0 0
        %1536 = vmatpush1.bf16.xpose.msra.mxu0 0
        %1537 = vmatprep.subr.bf16.mxu0 0
        %1538 = vmatpush1.bf16.xpose.msra.mxu0 0
        %1539 = vmatprep.subr.bf16.mxu0 0
        %1540 = vmatpush1.bf16.xpose.msra.mxu0 0
        %1541 = vmatprep.subr.bf16.mxu0 0
        %1542 = vmatpush1.bf16.xpose.msra.mxu0 0
        %1543 = vmatprep.subr.bf16.mxu0 0
        %1544 = vmatpush1.bf16.xpose.msra.mxu0 0
        %1545 = vmatprep.subr.bf16.mxu0 0
        %1546 = vmatpush1.bf16.xpose.msra.mxu0 0
        %1547 = vmatprep.mubr.bf16.mxu0 0
        %1548 = vmatmul.mubr.bf16.gmra.mrb[0].mxu0 %v1486
        %v1549 = vpop.f32.mrb[0].mxu0
        %v1550 = vadd.f32 %v1457, %v1549
        %v1551 = vpop.f32.mrb[0].mxu0
        %v1552 = vpop.f32.mrb[0].mxu0
        %v1553 = vadd.f32 %v1462, %v1552
        %v1554 = vpop.f32.mrb[0].mxu0
        %1555 = vmatprep.mubr.bf16.mxu0 0
        %1556 = vmatmul.mubr.bf16.gmra.mrb[0].mxu0 %v1489
        %v1557 = vpop.f32.mrb[0].mxu0
        %v1558 = vadd.f32 %v1467, %v1557
        %v1559 = vpop.f32.mrb[0].mxu0
        %v1560 = vpop.f32.mrb[0].mxu0
        %v1561 = vadd.f32 %v1472, %v1560
        %v1562 = vpop.f32.mrb[0].mxu0
        %1563 = vdwg.mxu0
        %v1564 = vmax.f32 %v1550, 0.0
        %v1565 = vmax.f32 %v1553, 0.0
        %v1566 = vmax.f32 %v1558, 0.0
        %v1567 = vmax.f32 %v1561, 0.0
        %1568 = vst [vmem:[%s284] sm:$0xff] %v1564
        %1569 = vst [vmem:[%s284 + $0x8] sm:$0xff] %v1565
        %1570 = vst [vmem:[%s284 + $0x10] sm:$0xff] %v1566
        %1571 = vst [vmem:[%s284 + $0x18] sm:$0xff] %v1567
        %s1572 = sand.u32 %s180, 1
        %s1573 = scalar_lea.sflag [#allocation3], %s1572
        %s1574 = sand.u32 %s180, 1
        %s1575 = smul.addr %s1574, 32
        %s1576 = scalar_lea.vmem [#allocation2], %s1575
        // Predicated region
        $region45: #{tpu_custom_call.1} parent=43 // pred_check
          %p1577 = pneg %p190
        $region46: #{tpu_custom_call.1} parent=43 // pred_check_branch
          %1579 = sbr.rel (%p1577) target = $region48
        $region47: #{tpu_custom_call.1} parent=43 // pred_region
          %s1581 = ssub.s32 512, 512
          %1582 = vsyncadd %s1573, %s1581
          %s1583 = smul.addr %s24, 8
          %s1584 = sadd.s32 %s25, %s1583
          %s1585 = smul.addr %s1584, 128
          %s1586 = scalar_lea.hbm %s6, %s1585
          %s1587 = sshll.u32 %s1576, 4
          %s1588 = int_to_ptr.vmem [resolvable:$true] %s1587
          %1593 = dma.vmem_to_hbm [thread:$0]  %s1588, 512, %s1586, %s1573, 128, 256, 8
        $region48: #{tpu_custom_call.1} parent=43 // pred_fallthru
          _
      $region44: #{tpu_custom_call.1} parent=5 // pred_fallthru
        _
      %p1594 = scmp.le.s32.totalorder 2, %s15
      // Predicated region
      $region49: #{tpu_custom_call.1} parent=5 // pred_check
        %p1595 = pneg %p1594
      $region50: #{tpu_custom_call.1} parent=5 // pred_check_branch
        %1597 = sbr.rel (%p1595) target = $region52
      $region51: #{tpu_custom_call.1} parent=5 // pred_region
        %s1598 = ssub.s32 %s15, 2
        // Predicated region
        $region53: #{tpu_custom_call.1} parent=51 // pred_check
          %p1599 = pneg %p196
        $region54: #{tpu_custom_call.1} parent=51 // pred_check_branch
          %1601 = sbr.rel (%p1599) target = $region56
        $region55: #{tpu_custom_call.1} parent=51 // pred_region
          %s1602 = sand.u32 %s181, 1
          %s1603 = scalar_lea.sflag [#allocation3], %s1602
          %s1604 = sand.u32 %s181, 1
          %s1605 = smul.addr %s1604, 32
          %s1606 = scalar_lea.vmem [#allocation2], %s1605
          %1607 = dma.done %s1603, 512
        $region56: #{tpu_custom_call.1} parent=51 // pred_fallthru
          _
      $region52: #{tpu_custom_call.1} parent=5 // pred_fallthru
        _
    $region6: #{tpu_custom_call.1} parent=1 // loop_footer
      %s19 = sadd.s32 1, %s15
    $region7: #{tpu_custom_call.1} parent=1 // loop_footer_branch
      %14 = sbr.rel target = $region3
    $region8: #{tpu_custom_call.1} parent=1 // loop_exit
      _
    %1608 = vsyncpa [#allocation3], 1
    %s1609 = scalar_lea.sflag [#allocation3], 1
    %1610 = vsyncpa %s1609, 1

</llo_original>
